<compile_context>
chip_gen: v6e
topology: v6e:2x2x1
jax: 0.10.0
libtpu: 0.0.40
codegen_flags: <defaults>
</compile_context>

<pallas_src>
import functools

import jax
import jax.numpy as jnp
from jax.experimental import pallas as pl
from jax.experimental.pallas import tpu as pltpu


def _round_up(x, m):
    return ((x + m - 1) // m) * m


def _choose_t_chunk(T, max_chunk=64):
    """Largest divisor of T that is <= max_chunk (bounds gates_scr VMEM)."""
    for c in range(min(T, max_chunk), 0, -1):
        if T % c == 0:
            return c
    return T


# ----------------------------------------------------------------------------
# Serial LSTM recurrence over n_steps timesteps (runs inside the fused kernel)
# ----------------------------------------------------------------------------
def _recurrence(gates_ref, whh_bf16, h0, c0, *, n_steps, Bp, H,
                act_scr=None, act_row0=0):
    """gates_ref rows [t*Bp, (t+1)*Bp) hold x_t @ W_ih^T + bias, gate order
    [i, f, o, g].  whh_bf16 is a (H, 4H) bf16 value held resident across the
    loop.  If act_scr is given, h_t is stored at rows act_row0 + t*Bp."""

    def step(t, carry):
        h, c = carry
        r = pl.multiple_of(t * Bp, 8)                     # aligned sublane start
        gates = gates_ref[pl.ds(r, Bp), :] + jnp.dot(
            h.astype(jnp.bfloat16), whh_bf16,
            preferred_element_type=jnp.float32)            # (Bp, 4H) f32
        # [i, f, o | g]: sigmoid over 3H lanes, tanh over the last H lanes only.
        sig = jax.nn.sigmoid(gates[:, 0:3 * H])
        g_g = jnp.tanh(gates[:, 3 * H:4 * H])
        i_g = sig[:, 0:H]
        f_g = sig[:, H:2 * H]
        o_g = sig[:, 2 * H:3 * H]
        c_new = f_g * c + i_g * g_g
        h_new = o_g * jnp.tanh(c_new)
        if act_scr is not None:
            ar = pl.multiple_of(act_row0 + t * Bp, 8)
            act_scr[pl.ds(ar, Bp), :] = h_new
        return h_new, c_new

    unroll = True if n_steps <= 16 else 4                  # avoid vreg spills
    return jax.lax.fori_loop(0, n_steps, step, (h0, c0), unroll=unroll)


# ----------------------------------------------------------------------------
# Fused kernel: all LSTM layers + classifier head in one pallas_call
# ----------------------------------------------------------------------------
def _lstm_stack_kernel(*refs, T, B, Bp, H, L, Tc):
    if L > 1:
        (gx0_ref, whh_ref, wih_ref, brest_ref, wcls_ref, bcls_ref,
         out_ref, act_scr, gates_scr) = refs
    else:
        gx0_ref, whh_ref, wcls_ref, bcls_ref, out_ref = refs
        wih_ref = brest_ref = act_scr = gates_scr = None

    zeros = jnp.zeros((Bp, H), jnp.float32)

    # ---- Layer 0: gate preactivations were gathered from the projected
    # embedding table, so only the serial h @ W_hh part remains.
    h, c = _recurrence(gx0_ref, whh_ref[0], zeros, zeros,
                       n_steps=T, Bp=Bp, H=H,
                       act_scr=(act_scr if L > 1 else None), act_row0=0)

    # ---- Layers 1..L-1: T-chunked batched input projection on the MXU, then
    # the serial recurrence over that chunk.  The previous layer's hidden
    # sequence lives in VMEM (act_scr) and is overwritten in place chunk by
    # chunk (each chunk is fully consumed into gates_scr before being rewritten).
    n_chunks = T // Tc
    for l in range(1, L):
        wih = wih_ref[l - 1]               # (H, 4H) bf16, loaded once per layer
        whh = whh_ref[l]                   # (H, 4H) bf16
        bias = brest_ref[l - 1]            # (1, 4H) f32
        h, c = zeros, zeros
        store = l < L - 1                  # last layer only needs the final h
        for ci in range(n_chunks):
            r0 = ci * Tc * Bp              # static, multiple of 8
            x_chunk = act_scr[pl.ds(r0, Tc * Bp), :]          # (Tc*Bp, H) f32
            gates_scr[...] = jnp.dot(
                x_chunk.astype(jnp.bfloat16), wih,
                preferred_element_type=jnp.float32) + bias
            h, c = _recurrence(gates_scr, whh, h, c,
                               n_steps=Tc, Bp=Bp, H=H,
                               act_scr=(act_scr if store else None),
                               act_row0=r0)

    # ---- Classifier on the last timestep: VPU multiply + row reduce
    # (no N=1 MXU matmul), dropout is eval-mode identity.
    logits = jnp.sum(h[:B] * wcls_ref[...], axis=-1, keepdims=True) + bcls_ref[...]
    out_ref[...] = jax.nn.sigmoid(logits).astype(out_ref.dtype)


def lstm_stack(gx0, whh_all, wih_rest, b_rest, w_cls, b_cls, *, T, B, Bp, H, L):
    Tc = _choose_t_chunk(T)
    kernel = functools.partial(_lstm_stack_kernel,
                               T=T, B=B, Bp=Bp, H=H, L=L, Tc=Tc)

    in_specs = [
        pl.BlockSpec(gx0.shape, lambda i: (0, 0)),           # (T*Bp, 4H) f32
        pl.BlockSpec(whh_all.shape, lambda i: (0, 0, 0)),     # (L, H, 4H) bf16
    ]
    inputs = [gx0, whh_all]
    if L > 1:
        in_specs += [
            pl.BlockSpec(wih_rest.shape, lambda i: (0, 0, 0)),  # (L-1, H, 4H) bf16
            pl.BlockSpec(b_rest.shape, lambda i: (0, 0, 0)),    # (L-1, 1, 4H) f32
        ]
        inputs += [wih_rest, b_rest]
    in_specs += [
        pl.BlockSpec(w_cls.shape, lambda i: (0, 0)),            # (1, H)
        pl.BlockSpec(b_cls.shape, lambda i: (0, 0)),            # (1, 1)
    ]
    inputs += [w_cls, b_cls]

    scratch_shapes = []
    if L > 1:
        scratch_shapes = [
            pltpu.VMEM((T * Bp, H), jnp.float32),        # inter-layer activations
            pltpu.VMEM((Tc * Bp, 4 * H), jnp.float32),   # per-chunk gate projections
        ]

    return pl.pallas_call(
        kernel,
        out_shape=jax.ShapeDtypeStruct((B, 1), jnp.float32),
        grid_spec=pltpu.PrefetchScalarGridSpec(
            num_scalar_prefetch=0,
            grid=(1,),
            in_specs=in_specs,
            out_specs=pl.BlockSpec((B, 1), lambda i: (0, 0)),
            scratch_shapes=scratch_shapes,
        ),
        compiler_params=pltpu.CompilerParams(
            dimension_semantics=("arbitrary",)),   # one serial pass
    )(*inputs)


# ----------------------------------------------------------------------------
# Parameter packing (gate permutation + frozen-embedding projection) + forward
# ----------------------------------------------------------------------------
def init_params(key, vocab_size, embedding_dim, hidden_dim, num_layers):
    H, H4 = hidden_dim, 4 * hidden_dim
    keys = jax.random.split(key, 2 + 4 * num_layers)
    bound = 1.0 / jnp.sqrt(hidden_dim)

    # PyTorch gate row order is [i, f, g, o]; re-pack to [i, f, o, g] so sigmoid
    # covers lanes [0, 3H) and tanh only [3H, 4H).
    perm = jnp.concatenate([
        jnp.arange(0, H), jnp.arange(H, 2 * H),
        jnp.arange(3 * H, 4 * H), jnp.arange(2 * H, 3 * H)])

    # Fixed embedding table (fix_embedding=True -> constant weights).
    embedding = jax.random.normal(keys[0], (vocab_size, embedding_dim), jnp.float32)

    whh_all, wih_rest, b_rest = [], [], []
    proj_table = None
    for layer in range(num_layers):
        in_dim = embedding_dim if layer == 0 else hidden_dim
        k = keys[1 + 4 * layer: 1 + 4 * (layer + 1)]
        w_ih = jax.random.uniform(k[0], (H4, in_dim), jnp.float32, -bound, bound)
        w_hh = jax.random.uniform(k[1], (H4, H), jnp.float32, -bound, bound)
        b_ih = jax.random.uniform(k[2], (H4,), jnp.float32, -bound, bound)
        b_hh = jax.random.uniform(k[3], (H4,), jnp.float32, -bound, bound)
        w_ih = w_ih[perm]
        w_hh = w_hh[perm]
        bias = (b_ih + b_hh)[perm].reshape(1, H4)
        whh_all.append(w_hh.T.astype(jnp.bfloat16))        # (H, 4H) bf16
        if layer == 0:
            # Frozen embedding: fold lookup + layer-0 input projection into a
            # single projected table P = E @ W_ih0^T + b of shape (VOCAB, 4H).
            proj_table = jnp.dot(embedding, w_ih.T) + bias
        else:
            wih_rest.append(w_ih.T.astype(jnp.bfloat16))   # (H, 4H) bf16
            b_rest.append(bias)                            # (1, 4H) f32

    params = {
        "proj_table": proj_table,                          # (VOCAB, 4H) f32
        "whh_all": jnp.stack(whh_all),                     # (L, H, 4H) bf16
        "wih_rest": jnp.stack(wih_rest) if num_layers > 1 else None,
        "b_rest": jnp.stack(b_rest) if num_layers > 1 else None,
    }

    cls_bound = 1.0 / jnp.sqrt(hidden_dim)
    params["cls_w"] = jax.random.uniform(keys[-1], (1, H), jnp.float32,
                                         -cls_bound, cls_bound)
    params["cls_b"] = jnp.zeros((1, 1), jnp.float32)
    return params


def lstm_net_forward(params, token_ids, hidden_dim, num_layers):
    """token_ids: (B, T) int32. Returns (B, 1) float32 probabilities."""
    B, T = token_ids.shape
    H = hidden_dim
    Bp = _round_up(B, 8)       # sublane-aligned batch rows inside the kernel

    # One gather of precomputed layer-0 gate preactivations (lane-dense, 4H=128k).
    gx = jnp.take(params["proj_table"], token_ids, axis=0)   # (B, T, 4H)
    gx = jnp.transpose(gx, (1, 0, 2))                        # (T, B, 4H) time-major
    if Bp != B:
        gx = jnp.pad(gx, ((0, 0), (0, Bp - B), (0, 0)))      # padded rows stay 0
    gx = gx.reshape(T * Bp, 4 * H)                           # row t*Bp + b

    # TODO(synk): nn.Dropout is identity in eval mode; no stochastic mask applied.
    return lstm_stack(gx, params["whh_all"], params["wih_rest"],
                      params["b_rest"], params["cls_w"], params["cls_b"],
                      T=T, B=B, Bp=Bp, H=H, L=num_layers)


if __name__ == "__main__":
    VOCAB = 50
    EMBED_DIM = 16
    HIDDEN_DIM = 32
    NUM_LAYERS = 2
    BATCH = 2
    SEQ = 8

    key = jax.random.PRNGKey(0)
    k_params, k_tokens = jax.random.split(key)

    params = init_params(k_params, VOCAB, EMBED_DIM, HIDDEN_DIM, NUM_LAYERS)
    token_ids = jax.random.randint(k_tokens, (BATCH, SEQ), 0, VOCAB, jnp.int32)

    fwd = jax.jit(functools.partial(lstm_net_forward,
                                    hidden_dim=HIDDEN_DIM,
                                    num_layers=NUM_LAYERS))
    out = jax.block_until_ready(fwd(params, token_ids))

    assert out.shape == (BATCH, 1), out.shape
    assert bool(jnp.all(jnp.isfinite(out)))
    assert bool(jnp.all((out >= 0.0) & (out <= 1.0)))
    print("KERNEL_OK")
</pallas_src>

<mosaic_0001>
module attributes {stable_mosaic.version = 11 : i64} {
  func.func @_lstm_stack_kernel(%arg0: i32, %arg1: memref<64x128xf32, #tpu.memory_space<vmem>>, %arg2: memref<2x32x128xbf16, #tpu.memory_space<vmem>>, %arg3: memref<1x32x128xbf16, #tpu.memory_space<vmem>>, %arg4: memref<1x1x128xf32, #tpu.memory_space<vmem>>, %arg5: memref<1x32xf32, #tpu.memory_space<vmem>>, %arg6: memref<1x1xf32, #tpu.memory_space<vmem>>, %arg7: memref<2x1xf32, #tpu.memory_space<vmem>>, %arg8: memref<64x32xf32, #tpu.memory_space<vmem>>, %arg9: memref<64x128xf32, #tpu.memory_space<vmem>>) attributes {dimension_semantics = [#tpu.dimension_semantics<arbitrary>], iteration_bounds = array<i64: 1>, scalar_prefetch = 0 : i64, scratch_operands = 2 : i64, tpu.core_type = #tpu.core_type<tc>, window_params = [{pipeline_mode = #tpu.pipeline_mode<synchronous>, transform_indices = @transform_0, window_bounds = array<i64: 64, 128>}, {pipeline_mode = #tpu.pipeline_mode<synchronous>, transform_indices = @transform_1, window_bounds = array<i64: 2, 32, 128>}, {pipeline_mode = #tpu.pipeline_mode<synchronous>, transform_indices = @transform_2, window_bounds = array<i64: 1, 32, 128>}, {pipeline_mode = #tpu.pipeline_mode<synchronous>, transform_indices = @transform_3, window_bounds = array<i64: 1, 1, 128>}, {pipeline_mode = #tpu.pipeline_mode<synchronous>, transform_indices = @transform_4, window_bounds = array<i64: 1, 32>}, {pipeline_mode = #tpu.pipeline_mode<synchronous>, transform_indices = @transform_5, window_bounds = array<i64: 1, 1>}, {pipeline_mode = #tpu.pipeline_mode<synchronous>, transform_indices = @transform_6, window_bounds = array<i64: 2, 1>}]} {
    %cst = arith.constant 0.000000e+00 : f32
    %0 = vector.broadcast %cst : f32 to vector<8x32xf32>
    %c0 = arith.constant 0 : index
    %c0_0 = arith.constant 0 : index
    %c0_1 = arith.constant 0 : index
    %1 = vector.load %arg2[%c0, %c0_0, %c0_1] : memref<2x32x128xbf16, #tpu.memory_space<vmem>>, vector<1x32x128xbf16>
    %2 = vector.shape_cast %1 : vector<1x32x128xbf16> to vector<32x128xbf16>
    %c0_i32 = arith.constant 0 : i32
    %c8_i32 = arith.constant 8 : i32
    %3 = arith.muli %c0_i32, %c8_i32 : i32
    %4 = tpu.assume_multiple %3, 8 : i32
    %5 = arith.index_cast %4 : i32 to index
    %c0_2 = arith.constant 0 : index
    %6 = vector.load %arg1[%5, %c0_2] : memref<64x128xf32, #tpu.memory_space<vmem>>, vector<8x128xf32>
    %7 = arith.truncf %0 : vector<8x32xf32> to vector<8x32xbf16>
    %cst_3 = arith.constant dense<0.000000e+00> : vector<8x128xf32>
    %8 = tpu.matmul %7, %2, %cst_3 {dimension_numbers = #tpu.dot_dimension_numbers<[1], [0], [0], [1], [0, 0, 1, 1], [], []>} : vector<8x32xbf16>, vector<32x128xbf16>, vector<8x128xf32> -> vector<8x128xf32>
    %9 = arith.addf %6, %8 : vector<8x128xf32>
    %10 = vector.extract_strided_slice %9 {offsets = [0, 0], sizes = [8, 96], strides = [1, 1]} : vector<8x128xf32> to vector<8x96xf32>
    %11 = arith.negf %10 : vector<8x96xf32>
    %12 = math.exp %11 : vector<8x96xf32>
    %cst_4 = arith.constant 1.000000e+00 : f32
    %13 = vector.broadcast %cst_4 : f32 to vector<8x96xf32>
    %14 = arith.addf %13, %12 : vector<8x96xf32>
    %15 = arith.divf %13, %14 : vector<8x96xf32>
    %16 = vector.extract_strided_slice %9 {offsets = [0, 96], sizes = [8, 32], strides = [1, 1]} : vector<8x128xf32> to vector<8x32xf32>
    %17 = math.tanh %16 : vector<8x32xf32>
    %18 = vector.extract_strided_slice %15 {offsets = [0, 0], sizes = [8, 32], strides = [1, 1]} : vector<8x96xf32> to vector<8x32xf32>
    %19 = vector.extract_strided_slice %15 {offsets = [0, 32], sizes = [8, 32], strides = [1, 1]} : vector<8x96xf32> to vector<8x32xf32>
    %20 = vector.extract_strided_slice %15 {offsets = [0, 64], sizes = [8, 32], strides = [1, 1]} : vector<8x96xf32> to vector<8x32xf32>
    %21 = arith.mulf %19, %0 : vector<8x32xf32>
    %22 = arith.mulf %18, %17 : vector<8x32xf32>
    %23 = arith.addf %21, %22 : vector<8x32xf32>
    %24 = math.tanh %23 : vector<8x32xf32>
    %25 = arith.mulf %20, %24 : vector<8x32xf32>
    %c8_i32_5 = arith.constant 8 : i32
    %26 = arith.muli %c0_i32, %c8_i32_5 : i32
    %c0_i32_6 = arith.constant 0 : i32
    %27 = arith.addi %c0_i32_6, %26 : i32
    %28 = tpu.assume_multiple %27, 8 : i32
    %29 = arith.index_cast %28 : i32 to index
    %c0_7 = arith.constant 0 : index
    %30 = vector.load %arg8[%29, %c0_7] : memref<64x32xf32, #tpu.memory_space<vmem>>, vector<8x32xf32>
    tpu.vector_store %arg8[%29, %c0_7], %25 {strides = array<i32>} : memref<64x32xf32, #tpu.memory_space<vmem>>, vector<8x32xf32>,
    %c1_i32 = arith.constant 1 : i32
    %c8_i32_8 = arith.constant 8 : i32
    %31 = arith.muli %c1_i32, %c8_i32_8 : i32
    %32 = tpu.assume_multiple %31, 8 : i32
    %33 = arith.index_cast %32 : i32 to index
    %c0_9 = arith.constant 0 : index
    %34 = vector.load %arg1[%33, %c0_9] : memref<64x128xf32, #tpu.memory_space<vmem>>, vector<8x128xf32>
    %35 = arith.truncf %25 : vector<8x32xf32> to vector<8x32xbf16>
    %cst_10 = arith.constant dense<0.000000e+00> : vector<8x128xf32>
    %36 = tpu.matmul %35, %2, %cst_10 {dimension_numbers = #tpu.dot_dimension_numbers<[1], [0], [0], [1], [0, 0, 1, 1], [], []>} : vector<8x32xbf16>, vector<32x128xbf16>, vector<8x128xf32> -> vector<8x128xf32>
    %37 = arith.addf %34, %36 : vector<8x128xf32>
    %38 = vector.extract_strided_slice %37 {offsets = [0, 0], sizes = [8, 96], strides = [1, 1]} : vector<8x128xf32> to vector<8x96xf32>
    %39 = arith.negf %38 : vector<8x96xf32>
    %40 = math.exp %39 : vector<8x96xf32>
    %cst_11 = arith.constant 1.000000e+00 : f32
    %41 = vector.broadcast %cst_11 : f32 to vector<8x96xf32>
    %42 = arith.addf %41, %40 : vector<8x96xf32>
    %43 = arith.divf %41, %42 : vector<8x96xf32>
    %44 = vector.extract_strided_slice %37 {offsets = [0, 96], sizes = [8, 32], strides = [1, 1]} : vector<8x128xf32> to vector<8x32xf32>
    %45 = math.tanh %44 : vector<8x32xf32>
    %46 = vector.extract_strided_slice %43 {offsets = [0, 0], sizes = [8, 32], strides = [1, 1]} : vector<8x96xf32> to vector<8x32xf32>
    %47 = vector.extract_strided_slice %43 {offsets = [0, 32], sizes = [8, 32], strides = [1, 1]} : vector<8x96xf32> to vector<8x32xf32>
    %48 = vector.extract_strided_slice %43 {offsets = [0, 64], sizes = [8, 32], strides = [1, 1]} : vector<8x96xf32> to vector<8x32xf32>
    %49 = arith.mulf %47, %23 : vector<8x32xf32>
    %50 = arith.mulf %46, %45 : vector<8x32xf32>
    %51 = arith.addf %49, %50 : vector<8x32xf32>
    %52 = math.tanh %51 : vector<8x32xf32>
    %53 = arith.mulf %48, %52 : vector<8x32xf32>
    %c8_i32_12 = arith.constant 8 : i32
    %54 = arith.muli %c1_i32, %c8_i32_12 : i32
    %c0_i32_13 = arith.constant 0 : i32
    %55 = arith.addi %c0_i32_13, %54 : i32
    %56 = tpu.assume_multiple %55, 8 : i32
    %57 = arith.index_cast %56 : i32 to index
    %c0_14 = arith.constant 0 : index
    %58 = vector.load %arg8[%57, %c0_14] : memref<64x32xf32, #tpu.memory_space<vmem>>, vector<8x32xf32>
    tpu.vector_store %arg8[%57, %c0_14], %53 {strides = array<i32>} : memref<64x32xf32, #tpu.memory_space<vmem>>, vector<8x32xf32>,
    %c2_i32 = arith.constant 2 : i32
    %c8_i32_15 = arith.constant 8 : i32
    %59 = arith.muli %c2_i32, %c8_i32_15 : i32
    %60 = tpu.assume_multiple %59, 8 : i32
    %61 = arith.index_cast %60 : i32 to index
    %c0_16 = arith.constant 0 : index
    %62 = vector.load %arg1[%61, %c0_16] : memref<64x128xf32, #tpu.memory_space<vmem>>, vector<8x128xf32>
    %63 = arith.truncf %53 : vector<8x32xf32> to vector<8x32xbf16>
    %cst_17 = arith.constant dense<0.000000e+00> : vector<8x128xf32>
    %64 = tpu.matmul %63, %2, %cst_17 {dimension_numbers = #tpu.dot_dimension_numbers<[1], [0], [0], [1], [0, 0, 1, 1], [], []>} : vector<8x32xbf16>, vector<32x128xbf16>, vector<8x128xf32> -> vector<8x128xf32>
    %65 = arith.addf %62, %64 : vector<8x128xf32>
    %66 = vector.extract_strided_slice %65 {offsets = [0, 0], sizes = [8, 96], strides = [1, 1]} : vector<8x128xf32> to vector<8x96xf32>
    %67 = arith.negf %66 : vector<8x96xf32>
    %68 = math.exp %67 : vector<8x96xf32>
    %cst_18 = arith.constant 1.000000e+00 : f32
    %69 = vector.broadcast %cst_18 : f32 to vector<8x96xf32>
    %70 = arith.addf %69, %68 : vector<8x96xf32>
    %71 = arith.divf %69, %70 : vector<8x96xf32>
    %72 = vector.extract_strided_slice %65 {offsets = [0, 96], sizes = [8, 32], strides = [1, 1]} : vector<8x128xf32> to vector<8x32xf32>
    %73 = math.tanh %72 : vector<8x32xf32>
    %74 = vector.extract_strided_slice %71 {offsets = [0, 0], sizes = [8, 32], strides = [1, 1]} : vector<8x96xf32> to vector<8x32xf32>
    %75 = vector.extract_strided_slice %71 {offsets = [0, 32], sizes = [8, 32], strides = [1, 1]} : vector<8x96xf32> to vector<8x32xf32>
    %76 = vector.extract_strided_slice %71 {offsets = [0, 64], sizes = [8, 32], strides = [1, 1]} : vector<8x96xf32> to vector<8x32xf32>
    %77 = arith.mulf %75, %51 : vector<8x32xf32>
    %78 = arith.mulf %74, %73 : vector<8x32xf32>
    %79 = arith.addf %77, %78 : vector<8x32xf32>
    %80 = math.tanh %79 : vector<8x32xf32>
    %81 = arith.mulf %76, %80 : vector<8x32xf32>
    %c8_i32_19 = arith.constant 8 : i32
    %82 = arith.muli %c2_i32, %c8_i32_19 : i32
    %c0_i32_20 = arith.constant 0 : i32
    %83 = arith.addi %c0_i32_20, %82 : i32
    %84 = tpu.assume_multiple %83, 8 : i32
    %85 = arith.index_cast %84 : i32 to index
    %c0_21 = arith.constant 0 : index
    %86 = vector.load %arg8[%85, %c0_21] : memref<64x32xf32, #tpu.memory_space<vmem>>, vector<8x32xf32>
    tpu.vector_store %arg8[%85, %c0_21], %81 {strides = array<i32>} : memref<64x32xf32, #tpu.memory_space<vmem>>, vector<8x32xf32>,
    %c3_i32 = arith.constant 3 : i32
    %c8_i32_22 = arith.constant 8 : i32
    %87 = arith.muli %c3_i32, %c8_i32_22 : i32
    %88 = tpu.assume_multiple %87, 8 : i32
    %89 = arith.index_cast %88 : i32 to index
    %c0_23 = arith.constant 0 : index
    %90 = vector.load %arg1[%89, %c0_23] : memref<64x128xf32, #tpu.memory_space<vmem>>, vector<8x128xf32>
    %91 = arith.truncf %81 : vector<8x32xf32> to vector<8x32xbf16>
    %cst_24 = arith.constant dense<0.000000e+00> : vector<8x128xf32>
    %92 = tpu.matmul %91, %2, %cst_24 {dimension_numbers = #tpu.dot_dimension_numbers<[1], [0], [0], [1], [0, 0, 1, 1], [], []>} : vector<8x32xbf16>, vector<32x128xbf16>, vector<8x128xf32> -> vector<8x128xf32>
    %93 = arith.addf %90, %92 : vector<8x128xf32>
    %94 = vector.extract_strided_slice %93 {offsets = [0, 0], sizes = [8, 96], strides = [1, 1]} : vector<8x128xf32> to vector<8x96xf32>
    %95 = arith.negf %94 : vector<8x96xf32>
    %96 = math.exp %95 : vector<8x96xf32>
    %cst_25 = arith.constant 1.000000e+00 : f32
    %97 = vector.broadcast %cst_25 : f32 to vector<8x96xf32>
    %98 = arith.addf %97, %96 : vector<8x96xf32>
    %99 = arith.divf %97, %98 : vector<8x96xf32>
    %100 = vector.extract_strided_slice %93 {offsets = [0, 96], sizes = [8, 32], strides = [1, 1]} : vector<8x128xf32> to vector<8x32xf32>
    %101 = math.tanh %100 : vector<8x32xf32>
    %102 = vector.extract_strided_slice %99 {offsets = [0, 0], sizes = [8, 32], strides = [1, 1]} : vector<8x96xf32> to vector<8x32xf32>
    %103 = vector.extract_strided_slice %99 {offsets = [0, 32], sizes = [8, 32], strides = [1, 1]} : vector<8x96xf32> to vector<8x32xf32>
    %104 = vector.extract_strided_slice %99 {offsets = [0, 64], sizes = [8, 32], strides = [1, 1]} : vector<8x96xf32> to vector<8x32xf32>
    %105 = arith.mulf %103, %79 : vector<8x32xf32>
    %106 = arith.mulf %102, %101 : vector<8x32xf32>
    %107 = arith.addf %105, %106 : vector<8x32xf32>
    %108 = math.tanh %107 : vector<8x32xf32>
    %109 = arith.mulf %104, %108 : vector<8x32xf32>
    %c8_i32_26 = arith.constant 8 : i32
    %110 = arith.muli %c3_i32, %c8_i32_26 : i32
    %c0_i32_27 = arith.constant 0 : i32
    %111 = arith.addi %c0_i32_27, %110 : i32
    %112 = tpu.assume_multiple %111, 8 : i32
    %113 = arith.index_cast %112 : i32 to index
    %c0_28 = arith.constant 0 : index
    %114 = vector.load %arg8[%113, %c0_28] : memref<64x32xf32, #tpu.memory_space<vmem>>, vector<8x32xf32>
    tpu.vector_store %arg8[%113, %c0_28], %109 {strides = array<i32>} : memref<64x32xf32, #tpu.memory_space<vmem>>, vector<8x32xf32>,
    %c4_i32 = arith.constant 4 : i32
    %c8_i32_29 = arith.constant 8 : i32
    %115 = arith.muli %c4_i32, %c8_i32_29 : i32
    %116 = tpu.assume_multiple %115, 8 : i32
    %117 = arith.index_cast %116 : i32 to index
    %c0_30 = arith.constant 0 : index
    %118 = vector.load %arg1[%117, %c0_30] : memref<64x128xf32, #tpu.memory_space<vmem>>, vector<8x128xf32>
    %119 = arith.truncf %109 : vector<8x32xf32> to vector<8x32xbf16>
    %cst_31 = arith.constant dense<0.000000e+00> : vector<8x128xf32>
    %120 = tpu.matmul %119, %2, %cst_31 {dimension_numbers = #tpu.dot_dimension_numbers<[1], [0], [0], [1], [0, 0, 1, 1], [], []>} : vector<8x32xbf16>, vector<32x128xbf16>, vector<8x128xf32> -> vector<8x128xf32>
    %121 = arith.addf %118, %120 : vector<8x128xf32>
    %122 = vector.extract_strided_slice %121 {offsets = [0, 0], sizes = [8, 96], strides = [1, 1]} : vector<8x128xf32> to vector<8x96xf32>
    %123 = arith.negf %122 : vector<8x96xf32>
    %124 = math.exp %123 : vector<8x96xf32>
    %cst_32 = arith.constant 1.000000e+00 : f32
    %125 = vector.broadcast %cst_32 : f32 to vector<8x96xf32>
    %126 = arith.addf %125, %124 : vector<8x96xf32>
    %127 = arith.divf %125, %126 : vector<8x96xf32>
    %128 = vector.extract_strided_slice %121 {offsets = [0, 96], sizes = [8, 32], strides = [1, 1]} : vector<8x128xf32> to vector<8x32xf32>
    %129 = math.tanh %128 : vector<8x32xf32>
    %130 = vector.extract_strided_slice %127 {offsets = [0, 0], sizes = [8, 32], strides = [1, 1]} : vector<8x96xf32> to vector<8x32xf32>
    %131 = vector.extract_strided_slice %127 {offsets = [0, 32], sizes = [8, 32], strides = [1, 1]} : vector<8x96xf32> to vector<8x32xf32>
    %132 = vector.extract_strided_slice %127 {offsets = [0, 64], sizes = [8, 32], strides = [1, 1]} : vector<8x96xf32> to vector<8x32xf32>
    %133 = arith.mulf %131, %107 : vector<8x32xf32>
    %134 = arith.mulf %130, %129 : vector<8x32xf32>
    %135 = arith.addf %133, %134 : vector<8x32xf32>
    %136 = math.tanh %135 : vector<8x32xf32>
    %137 = arith.mulf %132, %136 : vector<8x32xf32>
    %c8_i32_33 = arith.constant 8 : i32
    %138 = arith.muli %c4_i32, %c8_i32_33 : i32
    %c0_i32_34 = arith.constant 0 : i32
    %139 = arith.addi %c0_i32_34, %138 : i32
    %140 = tpu.assume_multiple %139, 8 : i32
    %141 = arith.index_cast %140 : i32 to index
    %c0_35 = arith.constant 0 : index
    %142 = vector.load %arg8[%141, %c0_35] : memref<64x32xf32, #tpu.memory_space<vmem>>, vector<8x32xf32>
    tpu.vector_store %arg8[%141, %c0_35], %137 {strides = array<i32>} : memref<64x32xf32, #tpu.memory_space<vmem>>, vector<8x32xf32>,
    %c5_i32 = arith.constant 5 : i32
    %c8_i32_36 = arith.constant 8 : i32
    %143 = arith.muli %c5_i32, %c8_i32_36 : i32
    %144 = tpu.assume_multiple %143, 8 : i32
    %145 = arith.index_cast %144 : i32 to index
    %c0_37 = arith.constant 0 : index
    %146 = vector.load %arg1[%145, %c0_37] : memref<64x128xf32, #tpu.memory_space<vmem>>, vector<8x128xf32>
    %147 = arith.truncf %137 : vector<8x32xf32> to vector<8x32xbf16>
    %cst_38 = arith.constant dense<0.000000e+00> : vector<8x128xf32>
    %148 = tpu.matmul %147, %2, %cst_38 {dimension_numbers = #tpu.dot_dimension_numbers<[1], [0], [0], [1], [0, 0, 1, 1], [], []>} : vector<8x32xbf16>, vector<32x128xbf16>, vector<8x128xf32> -> vector<8x128xf32>
    %149 = arith.addf %146, %148 : vector<8x128xf32>
    %150 = vector.extract_strided_slice %149 {offsets = [0, 0], sizes = [8, 96], strides = [1, 1]} : vector<8x128xf32> to vector<8x96xf32>
    %151 = arith.negf %150 : vector<8x96xf32>
    %152 = math.exp %151 : vector<8x96xf32>
    %cst_39 = arith.constant 1.000000e+00 : f32
    %153 = vector.broadcast %cst_39 : f32 to vector<8x96xf32>
    %154 = arith.addf %153, %152 : vector<8x96xf32>
    %155 = arith.divf %153, %154 : vector<8x96xf32>
    %156 = vector.extract_strided_slice %149 {offsets = [0, 96], sizes = [8, 32], strides = [1, 1]} : vector<8x128xf32> to vector<8x32xf32>
    %157 = math.tanh %156 : vector<8x32xf32>
    %158 = vector.extract_strided_slice %155 {offsets = [0, 0], sizes = [8, 32], strides = [1, 1]} : vector<8x96xf32> to vector<8x32xf32>
    %159 = vector.extract_strided_slice %155 {offsets = [0, 32], sizes = [8, 32], strides = [1, 1]} : vector<8x96xf32> to vector<8x32xf32>
    %160 = vector.extract_strided_slice %155 {offsets = [0, 64], sizes = [8, 32], strides = [1, 1]} : vector<8x96xf32> to vector<8x32xf32>
    %161 = arith.mulf %159, %135 : vector<8x32xf32>
    %162 = arith.mulf %158, %157 : vector<8x32xf32>
    %163 = arith.addf %161, %162 : vector<8x32xf32>
    %164 = math.tanh %163 : vector<8x32xf32>
    %165 = arith.mulf %160, %164 : vector<8x32xf32>
    %c8_i32_40 = arith.constant 8 : i32
    %166 = arith.muli %c5_i32, %c8_i32_40 : i32
    %c0_i32_41 = arith.constant 0 : i32
    %167 = arith.addi %c0_i32_41, %166 : i32
    %168 = tpu.assume_multiple %167, 8 : i32
    %169 = arith.index_cast %168 : i32 to index
    %c0_42 = arith.constant 0 : index
    %170 = vector.load %arg8[%169, %c0_42] : memref<64x32xf32, #tpu.memory_space<vmem>>, vector<8x32xf32>
    tpu.vector_store %arg8[%169, %c0_42], %165 {strides = array<i32>} : memref<64x32xf32, #tpu.memory_space<vmem>>, vector<8x32xf32>,
    %c6_i32 = arith.constant 6 : i32
    %c8_i32_43 = arith.constant 8 : i32
    %171 = arith.muli %c6_i32, %c8_i32_43 : i32
    %172 = tpu.assume_multiple %171, 8 : i32
    %173 = arith.index_cast %172 : i32 to index
    %c0_44 = arith.constant 0 : index
    %174 = vector.load %arg1[%173, %c0_44] : memref<64x128xf32, #tpu.memory_space<vmem>>, vector<8x128xf32>
    %175 = arith.truncf %165 : vector<8x32xf32> to vector<8x32xbf16>
    %cst_45 = arith.constant dense<0.000000e+00> : vector<8x128xf32>
    %176 = tpu.matmul %175, %2, %cst_45 {dimension_numbers = #tpu.dot_dimension_numbers<[1], [0], [0], [1], [0, 0, 1, 1], [], []>} : vector<8x32xbf16>, vector<32x128xbf16>, vector<8x128xf32> -> vector<8x128xf32>
    %177 = arith.addf %174, %176 : vector<8x128xf32>
    %178 = vector.extract_strided_slice %177 {offsets = [0, 0], sizes = [8, 96], strides = [1, 1]} : vector<8x128xf32> to vector<8x96xf32>
    %179 = arith.negf %178 : vector<8x96xf32>
    %180 = math.exp %179 : vector<8x96xf32>
    %cst_46 = arith.constant 1.000000e+00 : f32
    %181 = vector.broadcast %cst_46 : f32 to vector<8x96xf32>
    %182 = arith.addf %181, %180 : vector<8x96xf32>
    %183 = arith.divf %181, %182 : vector<8x96xf32>
    %184 = vector.extract_strided_slice %177 {offsets = [0, 96], sizes = [8, 32], strides = [1, 1]} : vector<8x128xf32> to vector<8x32xf32>
    %185 = math.tanh %184 : vector<8x32xf32>
    %186 = vector.extract_strided_slice %183 {offsets = [0, 0], sizes = [8, 32], strides = [1, 1]} : vector<8x96xf32> to vector<8x32xf32>
    %187 = vector.extract_strided_slice %183 {offsets = [0, 32], sizes = [8, 32], strides = [1, 1]} : vector<8x96xf32> to vector<8x32xf32>
    %188 = vector.extract_strided_slice %183 {offsets = [0, 64], sizes = [8, 32], strides = [1, 1]} : vector<8x96xf32> to vector<8x32xf32>
    %189 = arith.mulf %187, %163 : vector<8x32xf32>
    %190 = arith.mulf %186, %185 : vector<8x32xf32>
    %191 = arith.addf %189, %190 : vector<8x32xf32>
    %192 = math.tanh %191 : vector<8x32xf32>
    %193 = arith.mulf %188, %192 : vector<8x32xf32>
    %c8_i32_47 = arith.constant 8 : i32
    %194 = arith.muli %c6_i32, %c8_i32_47 : i32
    %c0_i32_48 = arith.constant 0 : i32
    %195 = arith.addi %c0_i32_48, %194 : i32
    %196 = tpu.assume_multiple %195, 8 : i32
    %197 = arith.index_cast %196 : i32 to index
    %c0_49 = arith.constant 0 : index
    %198 = vector.load %arg8[%197, %c0_49] : memref<64x32xf32, #tpu.memory_space<vmem>>, vector<8x32xf32>
    tpu.vector_store %arg8[%197, %c0_49], %193 {strides = array<i32>} : memref<64x32xf32, #tpu.memory_space<vmem>>, vector<8x32xf32>,
    %c7_i32 = arith.constant 7 : i32
    %c8_i32_50 = arith.constant 8 : i32
    %199 = arith.muli %c7_i32, %c8_i32_50 : i32
    %200 = tpu.assume_multiple %199, 8 : i32
    %201 = arith.index_cast %200 : i32 to index
    %c0_51 = arith.constant 0 : index
    %202 = vector.load %arg1[%201, %c0_51] : memref<64x128xf32, #tpu.memory_space<vmem>>, vector<8x128xf32>
    %203 = arith.truncf %193 : vector<8x32xf32> to vector<8x32xbf16>
    %cst_52 = arith.constant dense<0.000000e+00> : vector<8x128xf32>
    %204 = tpu.matmul %203, %2, %cst_52 {dimension_numbers = #tpu.dot_dimension_numbers<[1], [0], [0], [1], [0, 0, 1, 1], [], []>} : vector<8x32xbf16>, vector<32x128xbf16>, vector<8x128xf32> -> vector<8x128xf32>
    %205 = arith.addf %202, %204 : vector<8x128xf32>
    %206 = vector.extract_strided_slice %205 {offsets = [0, 0], sizes = [8, 96], strides = [1, 1]} : vector<8x128xf32> to vector<8x96xf32>
    %207 = arith.negf %206 : vector<8x96xf32>
    %208 = math.exp %207 : vector<8x96xf32>
    %cst_53 = arith.constant 1.000000e+00 : f32
    %209 = vector.broadcast %cst_53 : f32 to vector<8x96xf32>
    %210 = arith.addf %209, %208 : vector<8x96xf32>
    %211 = arith.divf %209, %210 : vector<8x96xf32>
    %212 = vector.extract_strided_slice %205 {offsets = [0, 96], sizes = [8, 32], strides = [1, 1]} : vector<8x128xf32> to vector<8x32xf32>
    %213 = math.tanh %212 : vector<8x32xf32>
    %214 = vector.extract_strided_slice %211 {offsets = [0, 0], sizes = [8, 32], strides = [1, 1]} : vector<8x96xf32> to vector<8x32xf32>
    %215 = vector.extract_strided_slice %211 {offsets = [0, 32], sizes = [8, 32], strides = [1, 1]} : vector<8x96xf32> to vector<8x32xf32>
    %216 = vector.extract_strided_slice %211 {offsets = [0, 64], sizes = [8, 32], strides = [1, 1]} : vector<8x96xf32> to vector<8x32xf32>
    %217 = arith.mulf %215, %191 : vector<8x32xf32>
    %218 = arith.mulf %214, %213 : vector<8x32xf32>
    %219 = arith.addf %217, %218 : vector<8x32xf32>
    %220 = math.tanh %219 : vector<8x32xf32>
    %221 = arith.mulf %216, %220 : vector<8x32xf32>
    %c8_i32_54 = arith.constant 8 : i32
    %222 = arith.muli %c7_i32, %c8_i32_54 : i32
    %c0_i32_55 = arith.constant 0 : i32
    %223 = arith.addi %c0_i32_55, %222 : i32
    %224 = tpu.assume_multiple %223, 8 : i32
    %225 = arith.index_cast %224 : i32 to index
    %c0_56 = arith.constant 0 : index
    %226 = vector.load %arg8[%225, %c0_56] : memref<64x32xf32, #tpu.memory_space<vmem>>, vector<8x32xf32>
    tpu.vector_store %arg8[%225, %c0_56], %221 {strides = array<i32>} : memref<64x32xf32, #tpu.memory_space<vmem>>, vector<8x32xf32>,
    %c8_i32_57 = arith.constant 8 : i32
    %c0_58 = arith.constant 0 : index
    %c0_59 = arith.constant 0 : index
    %c0_60 = arith.constant 0 : index
    %227 = vector.load %arg3[%c0_58, %c0_59, %c0_60] : memref<1x32x128xbf16, #tpu.memory_space<vmem>>, vector<1x32x128xbf16>
    %228 = vector.shape_cast %227 : vector<1x32x128xbf16> to vector<32x128xbf16>
    %c1 = arith.constant 1 : index
    %c0_61 = arith.constant 0 : index
    %c0_62 = arith.constant 0 : index
    %229 = vector.load %arg2[%c1, %c0_61, %c0_62] : memref<2x32x128xbf16, #tpu.memory_space<vmem>>, vector<1x32x128xbf16>
    %230 = vector.shape_cast %229 : vector<1x32x128xbf16> to vector<32x128xbf16>
    %c0_63 = arith.constant 0 : index
    %c0_64 = arith.constant 0 : index
    %c0_65 = arith.constant 0 : index
    %231 = vector.load %arg4[%c0_63, %c0_64, %c0_65] : memref<1x1x128xf32, #tpu.memory_space<vmem>>, vector<1x1x128xf32>
    %232 = vector.shape_cast %231 : vector<1x1x128xf32> to vector<1x128xf32>
    %c0_66 = arith.constant 0 : index
    %c0_67 = arith.constant 0 : index
    %233 = vector.load %arg8[%c0_66, %c0_67] : memref<64x32xf32, #tpu.memory_space<vmem>>, vector<64x32xf32>
    %234 = arith.truncf %233 : vector<64x32xf32> to vector<64x32xbf16>
    %cst_68 = arith.constant dense<0.000000e+00> : vector<64x128xf32>
    %235 = tpu.matmul %234, %228, %cst_68 {dimension_numbers = #tpu.dot_dimension_numbers<[1], [0], [0], [1], [0, 0, 1, 1], [], []>} : vector<64x32xbf16>, vector<32x128xbf16>, vector<64x128xf32> -> vector<64x128xf32>
    %236 = vector.broadcast %232 : vector<1x128xf32> to vector<64x128xf32>
    %237 = arith.addf %235, %236 : vector<64x128xf32>
    %c0_69 = arith.constant 0 : index
    %c0_70 = arith.constant 0 : index
    %238 = vector.load %arg9[%c0_69, %c0_70] : memref<64x128xf32, #tpu.memory_space<vmem>>, vector<64x128xf32>
    tpu.vector_store %arg9[%c0_69, %c0_70], %237 {strides = array<i32>} : memref<64x128xf32, #tpu.memory_space<vmem>>, vector<64x128xf32>,
    %c0_i32_71 = arith.constant 0 : i32
    %c8_i32_72 = arith.constant 8 : i32
    %239 = arith.muli %c0_i32_71, %c8_i32_72 : i32
    %240 = tpu.assume_multiple %239, 8 : i32
    %241 = arith.index_cast %240 : i32 to index
    %c0_73 = arith.constant 0 : index
    %242 = vector.load %arg9[%241, %c0_73] : memref<64x128xf32, #tpu.memory_space<vmem>>, vector<8x128xf32>
    %243 = arith.truncf %0 : vector<8x32xf32> to vector<8x32xbf16>
    %cst_74 = arith.constant dense<0.000000e+00> : vector<8x128xf32>
    %244 = tpu.matmul %243, %230, %cst_74 {dimension_numbers = #tpu.dot_dimension_numbers<[1], [0], [0], [1], [0, 0, 1, 1], [], []>} : vector<8x32xbf16>, vector<32x128xbf16>, vector<8x128xf32> -> vector<8x128xf32>
    %245 = arith.addf %242, %244 : vector<8x128xf32>
    %246 = vector.extract_strided_slice %245 {offsets = [0, 0], sizes = [8, 96], strides = [1, 1]} : vector<8x128xf32> to vector<8x96xf32>
    %247 = arith.negf %246 : vector<8x96xf32>
    %248 = math.exp %247 : vector<8x96xf32>
    %cst_75 = arith.constant 1.000000e+00 : f32
    %249 = vector.broadcast %cst_75 : f32 to vector<8x96xf32>
    %250 = arith.addf %249, %248 : vector<8x96xf32>
    %251 = arith.divf %249, %250 : vector<8x96xf32>
    %252 = vector.extract_strided_slice %245 {offsets = [0, 96], sizes = [8, 32], strides = [1, 1]} : vector<8x128xf32> to vector<8x32xf32>
    %253 = math.tanh %252 : vector<8x32xf32>
    %254 = vector.extract_strided_slice %251 {offsets = [0, 0], sizes = [8, 32], strides = [1, 1]} : vector<8x96xf32> to vector<8x32xf32>
    %255 = vector.extract_strided_slice %251 {offsets = [0, 32], sizes = [8, 32], strides = [1, 1]} : vector<8x96xf32> to vector<8x32xf32>
    %256 = vector.extract_strided_slice %251 {offsets = [0, 64], sizes = [8, 32], strides = [1, 1]} : vector<8x96xf32> to vector<8x32xf32>
    %257 = arith.mulf %255, %0 : vector<8x32xf32>
    %258 = arith.mulf %254, %253 : vector<8x32xf32>
    %259 = arith.addf %257, %258 : vector<8x32xf32>
    %260 = math.tanh %259 : vector<8x32xf32>
    %261 = arith.mulf %256, %260 : vector<8x32xf32>
    %c1_i32_76 = arith.constant 1 : i32
    %c8_i32_77 = arith.constant 8 : i32
    %262 = arith.muli %c1_i32_76, %c8_i32_77 : i32
    %263 = tpu.assume_multiple %262, 8 : i32
    %264 = arith.index_cast %263 : i32 to index
    %c0_78 = arith.constant 0 : index
    %265 = vector.load %arg9[%264, %c0_78] : memref<64x128xf32, #tpu.memory_space<vmem>>, vector<8x128xf32>
    %266 = arith.truncf %261 : vector<8x32xf32> to vector<8x32xbf16>
    %cst_79 = arith.constant dense<0.000000e+00> : vector<8x128xf32>
    %267 = tpu.matmul %266, %230, %cst_79 {dimension_numbers = #tpu.dot_dimension_numbers<[1], [0], [0], [1], [0, 0, 1, 1], [], []>} : vector<8x32xbf16>, vector<32x128xbf16>, vector<8x128xf32> -> vector<8x128xf32>
    %268 = arith.addf %265, %267 : vector<8x128xf32>
    %269 = vector.extract_strided_slice %268 {offsets = [0, 0], sizes = [8, 96], strides = [1, 1]} : vector<8x128xf32> to vector<8x96xf32>
    %270 = arith.negf %269 : vector<8x96xf32>
    %271 = math.exp %270 : vector<8x96xf32>
    %cst_80 = arith.constant 1.000000e+00 : f32
    %272 = vector.broadcast %cst_80 : f32 to vector<8x96xf32>
    %273 = arith.addf %272, %271 : vector<8x96xf32>
    %274 = arith.divf %272, %273 : vector<8x96xf32>
    %275 = vector.extract_strided_slice %268 {offsets = [0, 96], sizes = [8, 32], strides = [1, 1]} : vector<8x128xf32> to vector<8x32xf32>
    %276 = math.tanh %275 : vector<8x32xf32>
    %277 = vector.extract_strided_slice %274 {offsets = [0, 0], sizes = [8, 32], strides = [1, 1]} : vector<8x96xf32> to vector<8x32xf32>
    %278 = vector.extract_strided_slice %274 {offsets = [0, 32], sizes = [8, 32], strides = [1, 1]} : vector<8x96xf32> to vector<8x32xf32>
    %279 = vector.extract_strided_slice %274 {offsets = [0, 64], sizes = [8, 32], strides = [1, 1]} : vector<8x96xf32> to vector<8x32xf32>
    %280 = arith.mulf %278, %259 : vector<8x32xf32>
    %281 = arith.mulf %277, %276 : vector<8x32xf32>
    %282 = arith.addf %280, %281 : vector<8x32xf32>
    %283 = math.tanh %282 : vector<8x32xf32>
    %284 = arith.mulf %279, %283 : vector<8x32xf32>
    %c2_i32_81 = arith.constant 2 : i32
    %c8_i32_82 = arith.constant 8 : i32
    %285 = arith.muli %c2_i32_81, %c8_i32_82 : i32
    %286 = tpu.assume_multiple %285, 8 : i32
    %287 = arith.index_cast %286 : i32 to index
    %c0_83 = arith.constant 0 : index
    %288 = vector.load %arg9[%287, %c0_83] : memref<64x128xf32, #tpu.memory_space<vmem>>, vector<8x128xf32>
    %289 = arith.truncf %284 : vector<8x32xf32> to vector<8x32xbf16>
    %cst_84 = arith.constant dense<0.000000e+00> : vector<8x128xf32>
    %290 = tpu.matmul %289, %230, %cst_84 {dimension_numbers = #tpu.dot_dimension_numbers<[1], [0], [0], [1], [0, 0, 1, 1], [], []>} : vector<8x32xbf16>, vector<32x128xbf16>, vector<8x128xf32> -> vector<8x128xf32>
    %291 = arith.addf %288, %290 : vector<8x128xf32>
    %292 = vector.extract_strided_slice %291 {offsets = [0, 0], sizes = [8, 96], strides = [1, 1]} : vector<8x128xf32> to vector<8x96xf32>
    %293 = arith.negf %292 : vector<8x96xf32>
    %294 = math.exp %293 : vector<8x96xf32>
    %cst_85 = arith.constant 1.000000e+00 : f32
    %295 = vector.broadcast %cst_85 : f32 to vector<8x96xf32>
    %296 = arith.addf %295, %294 : vector<8x96xf32>
    %297 = arith.divf %295, %296 : vector<8x96xf32>
    %298 = vector.extract_strided_slice %291 {offsets = [0, 96], sizes = [8, 32], strides = [1, 1]} : vector<8x128xf32> to vector<8x32xf32>
    %299 = math.tanh %298 : vector<8x32xf32>
    %300 = vector.extract_strided_slice %297 {offsets = [0, 0], sizes = [8, 32], strides = [1, 1]} : vector<8x96xf32> to vector<8x32xf32>
    %301 = vector.extract_strided_slice %297 {offsets = [0, 32], sizes = [8, 32], strides = [1, 1]} : vector<8x96xf32> to vector<8x32xf32>
    %302 = vector.extract_strided_slice %297 {offsets = [0, 64], sizes = [8, 32], strides = [1, 1]} : vector<8x96xf32> to vector<8x32xf32>
    %303 = arith.mulf %301, %282 : vector<8x32xf32>
    %304 = arith.mulf %300, %299 : vector<8x32xf32>
    %305 = arith.addf %303, %304 : vector<8x32xf32>
    %306 = math.tanh %305 : vector<8x32xf32>
    %307 = arith.mulf %302, %306 : vector<8x32xf32>
    %c3_i32_86 = arith.constant 3 : i32
    %c8_i32_87 = arith.constant 8 : i32
    %308 = arith.muli %c3_i32_86, %c8_i32_87 : i32
    %309 = tpu.assume_multiple %308, 8 : i32
    %310 = arith.index_cast %309 : i32 to index
    %c0_88 = arith.constant 0 : index
    %311 = vector.load %arg9[%310, %c0_88] : memref<64x128xf32, #tpu.memory_space<vmem>>, vector<8x128xf32>
    %312 = arith.truncf %307 : vector<8x32xf32> to vector<8x32xbf16>
    %cst_89 = arith.constant dense<0.000000e+00> : vector<8x128xf32>
    %313 = tpu.matmul %312, %230, %cst_89 {dimension_numbers = #tpu.dot_dimension_numbers<[1], [0], [0], [1], [0, 0, 1, 1], [], []>} : vector<8x32xbf16>, vector<32x128xbf16>, vector<8x128xf32> -> vector<8x128xf32>
    %314 = arith.addf %311, %313 : vector<8x128xf32>
    %315 = vector.extract_strided_slice %314 {offsets = [0, 0], sizes = [8, 96], strides = [1, 1]} : vector<8x128xf32> to vector<8x96xf32>
    %316 = arith.negf %315 : vector<8x96xf32>
    %317 = math.exp %316 : vector<8x96xf32>
    %cst_90 = arith.constant 1.000000e+00 : f32
    %318 = vector.broadcast %cst_90 : f32 to vector<8x96xf32>
    %319 = arith.addf %318, %317 : vector<8x96xf32>
    %320 = arith.divf %318, %319 : vector<8x96xf32>
    %321 = vector.extract_strided_slice %314 {offsets = [0, 96], sizes = [8, 32], strides = [1, 1]} : vector<8x128xf32> to vector<8x32xf32>
    %322 = math.tanh %321 : vector<8x32xf32>
    %323 = vector.extract_strided_slice %320 {offsets = [0, 0], sizes = [8, 32], strides = [1, 1]} : vector<8x96xf32> to vector<8x32xf32>
    %324 = vector.extract_strided_slice %320 {offsets = [0, 32], sizes = [8, 32], strides = [1, 1]} : vector<8x96xf32> to vector<8x32xf32>
    %325 = vector.extract_strided_slice %320 {offsets = [0, 64], sizes = [8, 32], strides = [1, 1]} : vector<8x96xf32> to vector<8x32xf32>
    %326 = arith.mulf %324, %305 : vector<8x32xf32>
    %327 = arith.mulf %323, %322 : vector<8x32xf32>
    %328 = arith.addf %326, %327 : vector<8x32xf32>
    %329 = math.tanh %328 : vector<8x32xf32>
    %330 = arith.mulf %325, %329 : vector<8x32xf32>
    %c4_i32_91 = arith.constant 4 : i32
    %c8_i32_92 = arith.constant 8 : i32
    %331 = arith.muli %c4_i32_91, %c8_i32_92 : i32
    %332 = tpu.assume_multiple %331, 8 : i32
    %333 = arith.index_cast %332 : i32 to index
    %c0_93 = arith.constant 0 : index
    %334 = vector.load %arg9[%333, %c0_93] : memref<64x128xf32, #tpu.memory_space<vmem>>, vector<8x128xf32>
    %335 = arith.truncf %330 : vector<8x32xf32> to vector<8x32xbf16>
    %cst_94 = arith.constant dense<0.000000e+00> : vector<8x128xf32>
    %336 = tpu.matmul %335, %230, %cst_94 {dimension_numbers = #tpu.dot_dimension_numbers<[1], [0], [0], [1], [0, 0, 1, 1], [], []>} : vector<8x32xbf16>, vector<32x128xbf16>, vector<8x128xf32> -> vector<8x128xf32>
    %337 = arith.addf %334, %336 : vector<8x128xf32>
    %338 = vector.extract_strided_slice %337 {offsets = [0, 0], sizes = [8, 96], strides = [1, 1]} : vector<8x128xf32> to vector<8x96xf32>
    %339 = arith.negf %338 : vector<8x96xf32>
    %340 = math.exp %339 : vector<8x96xf32>
    %cst_95 = arith.constant 1.000000e+00 : f32
    %341 = vector.broadcast %cst_95 : f32 to vector<8x96xf32>
    %342 = arith.addf %341, %340 : vector<8x96xf32>
    %343 = arith.divf %341, %342 : vector<8x96xf32>
    %344 = vector.extract_strided_slice %337 {offsets = [0, 96], sizes = [8, 32], strides = [1, 1]} : vector<8x128xf32> to vector<8x32xf32>
    %345 = math.tanh %344 : vector<8x32xf32>
    %346 = vector.extract_strided_slice %343 {offsets = [0, 0], sizes = [8, 32], strides = [1, 1]} : vector<8x96xf32> to vector<8x32xf32>
    %347 = vector.extract_strided_slice %343 {offsets = [0, 32], sizes = [8, 32], strides = [1, 1]} : vector<8x96xf32> to vector<8x32xf32>
    %348 = vector.extract_strided_slice %343 {offsets = [0, 64], sizes = [8, 32], strides = [1, 1]} : vector<8x96xf32> to vector<8x32xf32>
    %349 = arith.mulf %347, %328 : vector<8x32xf32>
    %350 = arith.mulf %346, %345 : vector<8x32xf32>
    %351 = arith.addf %349, %350 : vector<8x32xf32>
    %352 = math.tanh %351 : vector<8x32xf32>
    %353 = arith.mulf %348, %352 : vector<8x32xf32>
    %c5_i32_96 = arith.constant 5 : i32
    %c8_i32_97 = arith.constant 8 : i32
    %354 = arith.muli %c5_i32_96, %c8_i32_97 : i32
    %355 = tpu.assume_multiple %354, 8 : i32
    %356 = arith.index_cast %355 : i32 to index
    %c0_98 = arith.constant 0 : index
    %357 = vector.load %arg9[%356, %c0_98] : memref<64x128xf32, #tpu.memory_space<vmem>>, vector<8x128xf32>
    %358 = arith.truncf %353 : vector<8x32xf32> to vector<8x32xbf16>
    %cst_99 = arith.constant dense<0.000000e+00> : vector<8x128xf32>
    %359 = tpu.matmul %358, %230, %cst_99 {dimension_numbers = #tpu.dot_dimension_numbers<[1], [0], [0], [1], [0, 0, 1, 1], [], []>} : vector<8x32xbf16>, vector<32x128xbf16>, vector<8x128xf32> -> vector<8x128xf32>
    %360 = arith.addf %357, %359 : vector<8x128xf32>
    %361 = vector.extract_strided_slice %360 {offsets = [0, 0], sizes = [8, 96], strides = [1, 1]} : vector<8x128xf32> to vector<8x96xf32>
    %362 = arith.negf %361 : vector<8x96xf32>
    %363 = math.exp %362 : vector<8x96xf32>
    %cst_100 = arith.constant 1.000000e+00 : f32
    %364 = vector.broadcast %cst_100 : f32 to vector<8x96xf32>
    %365 = arith.addf %364, %363 : vector<8x96xf32>
    %366 = arith.divf %364, %365 : vector<8x96xf32>
    %367 = vector.extract_strided_slice %360 {offsets = [0, 96], sizes = [8, 32], strides = [1, 1]} : vector<8x128xf32> to vector<8x32xf32>
    %368 = math.tanh %367 : vector<8x32xf32>
    %369 = vector.extract_strided_slice %366 {offsets = [0, 0], sizes = [8, 32], strides = [1, 1]} : vector<8x96xf32> to vector<8x32xf32>
    %370 = vector.extract_strided_slice %366 {offsets = [0, 32], sizes = [8, 32], strides = [1, 1]} : vector<8x96xf32> to vector<8x32xf32>
    %371 = vector.extract_strided_slice %366 {offsets = [0, 64], sizes = [8, 32], strides = [1, 1]} : vector<8x96xf32> to vector<8x32xf32>
    %372 = arith.mulf %370, %351 : vector<8x32xf32>
    %373 = arith.mulf %369, %368 : vector<8x32xf32>
    %374 = arith.addf %372, %373 : vector<8x32xf32>
    %375 = math.tanh %374 : vector<8x32xf32>
    %376 = arith.mulf %371, %375 : vector<8x32xf32>
    %c6_i32_101 = arith.constant 6 : i32
    %c8_i32_102 = arith.constant 8 : i32
    %377 = arith.muli %c6_i32_101, %c8_i32_102 : i32
    %378 = tpu.assume_multiple %377, 8 : i32
    %379 = arith.index_cast %378 : i32 to index
    %c0_103 = arith.constant 0 : index
    %380 = vector.load %arg9[%379, %c0_103] : memref<64x128xf32, #tpu.memory_space<vmem>>, vector<8x128xf32>
    %381 = arith.truncf %376 : vector<8x32xf32> to vector<8x32xbf16>
    %cst_104 = arith.constant dense<0.000000e+00> : vector<8x128xf32>
    %382 = tpu.matmul %381, %230, %cst_104 {dimension_numbers = #tpu.dot_dimension_numbers<[1], [0], [0], [1], [0, 0, 1, 1], [], []>} : vector<8x32xbf16>, vector<32x128xbf16>, vector<8x128xf32> -> vector<8x128xf32>
    %383 = arith.addf %380, %382 : vector<8x128xf32>
    %384 = vector.extract_strided_slice %383 {offsets = [0, 0], sizes = [8, 96], strides = [1, 1]} : vector<8x128xf32> to vector<8x96xf32>
    %385 = arith.negf %384 : vector<8x96xf32>
    %386 = math.exp %385 : vector<8x96xf32>
    %cst_105 = arith.constant 1.000000e+00 : f32
    %387 = vector.broadcast %cst_105 : f32 to vector<8x96xf32>
    %388 = arith.addf %387, %386 : vector<8x96xf32>
    %389 = arith.divf %387, %388 : vector<8x96xf32>
    %390 = vector.extract_strided_slice %383 {offsets = [0, 96], sizes = [8, 32], strides = [1, 1]} : vector<8x128xf32> to vector<8x32xf32>
    %391 = math.tanh %390 : vector<8x32xf32>
    %392 = vector.extract_strided_slice %389 {offsets = [0, 0], sizes = [8, 32], strides = [1, 1]} : vector<8x96xf32> to vector<8x32xf32>
    %393 = vector.extract_strided_slice %389 {offsets = [0, 32], sizes = [8, 32], strides = [1, 1]} : vector<8x96xf32> to vector<8x32xf32>
    %394 = vector.extract_strided_slice %389 {offsets = [0, 64], sizes = [8, 32], strides = [1, 1]} : vector<8x96xf32> to vector<8x32xf32>
    %395 = arith.mulf %393, %374 : vector<8x32xf32>
    %396 = arith.mulf %392, %391 : vector<8x32xf32>
    %397 = arith.addf %395, %396 : vector<8x32xf32>
    %398 = math.tanh %397 : vector<8x32xf32>
    %399 = arith.mulf %394, %398 : vector<8x32xf32>
    %c7_i32_106 = arith.constant 7 : i32
    %c8_i32_107 = arith.constant 8 : i32
    %400 = arith.muli %c7_i32_106, %c8_i32_107 : i32
    %401 = tpu.assume_multiple %400, 8 : i32
    %402 = arith.index_cast %401 : i32 to index
    %c0_108 = arith.constant 0 : index
    %403 = vector.load %arg9[%402, %c0_108] : memref<64x128xf32, #tpu.memory_space<vmem>>, vector<8x128xf32>
    %404 = arith.truncf %399 : vector<8x32xf32> to vector<8x32xbf16>
    %cst_109 = arith.constant dense<0.000000e+00> : vector<8x128xf32>
    %405 = tpu.matmul %404, %230, %cst_109 {dimension_numbers = #tpu.dot_dimension_numbers<[1], [0], [0], [1], [0, 0, 1, 1], [], []>} : vector<8x32xbf16>, vector<32x128xbf16>, vector<8x128xf32> -> vector<8x128xf32>
    %406 = arith.addf %403, %405 : vector<8x128xf32>
    %407 = vector.extract_strided_slice %406 {offsets = [0, 0], sizes = [8, 96], strides = [1, 1]} : vector<8x128xf32> to vector<8x96xf32>
    %408 = arith.negf %407 : vector<8x96xf32>
    %409 = math.exp %408 : vector<8x96xf32>
    %cst_110 = arith.constant 1.000000e+00 : f32
    %410 = vector.broadcast %cst_110 : f32 to vector<8x96xf32>
    %411 = arith.addf %410, %409 : vector<8x96xf32>
    %412 = arith.divf %410, %411 : vector<8x96xf32>
    %413 = vector.extract_strided_slice %406 {offsets = [0, 96], sizes = [8, 32], strides = [1, 1]} : vector<8x128xf32> to vector<8x32xf32>
    %414 = math.tanh %413 : vector<8x32xf32>
    %415 = vector.extract_strided_slice %412 {offsets = [0, 0], sizes = [8, 32], strides = [1, 1]} : vector<8x96xf32> to vector<8x32xf32>
    %416 = vector.extract_strided_slice %412 {offsets = [0, 32], sizes = [8, 32], strides = [1, 1]} : vector<8x96xf32> to vector<8x32xf32>
    %417 = vector.extract_strided_slice %412 {offsets = [0, 64], sizes = [8, 32], strides = [1, 1]} : vector<8x96xf32> to vector<8x32xf32>
    %418 = arith.mulf %416, %397 : vector<8x32xf32>
    %419 = arith.mulf %415, %414 : vector<8x32xf32>
    %420 = arith.addf %418, %419 : vector<8x32xf32>
    %421 = math.tanh %420 : vector<8x32xf32>
    %422 = arith.mulf %417, %421 : vector<8x32xf32>
    %c8_i32_111 = arith.constant 8 : i32
    %423 = vector.extract_strided_slice %422 {offsets = [0, 0], sizes = [2, 32], strides = [1, 1]} : vector<8x32xf32> to vector<2x32xf32>
    %c0_112 = arith.constant 0 : index
    %c0_113 = arith.constant 0 : index
    %424 = vector.load %arg5[%c0_112, %c0_113] : memref<1x32xf32, #tpu.memory_space<vmem>>, vector<1x32xf32>
    %425 = vector.broadcast %424 : vector<1x32xf32> to vector<2x32xf32>
    %426 = arith.mulf %423, %425 : vector<2x32xf32>
    %cst_114 = arith.constant dense<0.000000e+00> : vector<2xf32>
    %427 = vector.multi_reduction <add>, %426, %cst_114 [1] : vector<2x32xf32> to vector<2xf32>
    %428 = vector.shape_cast %427 : vector<2xf32> to vector<2x1xf32>
    %c0_115 = arith.constant 0 : index
    %c0_116 = arith.constant 0 : index
    %429 = vector.load %arg6[%c0_115, %c0_116] : memref<1x1xf32, #tpu.memory_space<vmem>>, vector<1x1xf32>
    %430 = vector.broadcast %429 : vector<1x1xf32> to vector<2x1xf32>
    %431 = arith.addf %428, %430 : vector<2x1xf32>
    %432 = arith.negf %431 : vector<2x1xf32>
    %433 = math.exp %432 : vector<2x1xf32>
    %cst_117 = arith.constant 1.000000e+00 : f32
    %434 = vector.broadcast %cst_117 : f32 to vector<2x1xf32>
    %435 = arith.addf %434, %433 : vector<2x1xf32>
    %436 = arith.divf %434, %435 : vector<2x1xf32>
    %c0_118 = arith.constant 0 : index
    %c0_119 = arith.constant 0 : index
    %437 = vector.load %arg7[%c0_118, %c0_119] : memref<2x1xf32, #tpu.memory_space<vmem>>, vector<2x1xf32>
    tpu.vector_store %arg7[%c0_118, %c0_119], %436 {strides = array<i32>} : memref<2x1xf32, #tpu.memory_space<vmem>>, vector<2x1xf32>,
    return
  }
  func.func @transform_0(%arg0: i32) -> (i32, i32) {
    %c0_i32 = arith.constant 0 : i32
    %c0_i32_0 = arith.constant 0 : i32
    %c0_i32_1 = arith.constant 0 : i32
    return %c0_i32, %c0_i32_0 : i32, i32
  }
  func.func @transform_1(%arg0: i32) -> (i32, i32, i32) {
    %c0_i32 = arith.constant 0 : i32
    %c0_i32_0 = arith.constant 0 : i32
    %c0_i32_1 = arith.constant 0 : i32
    %c0_i32_2 = arith.constant 0 : i32
    return %c0_i32, %c0_i32_0, %c0_i32_1 : i32, i32, i32
  }
  func.func @transform_2(%arg0: i32) -> (i32, i32, i32) {
    %c0_i32 = arith.constant 0 : i32
    %c0_i32_0 = arith.constant 0 : i32
    %c0_i32_1 = arith.constant 0 : i32
    %c0_i32_2 = arith.constant 0 : i32
    return %c0_i32, %c0_i32_0, %c0_i32_1 : i32, i32, i32
  }
  func.func @transform_3(%arg0: i32) -> (i32, i32, i32) {
    %c0_i32 = arith.constant 0 : i32
    %c0_i32_0 = arith.constant 0 : i32
    %c0_i32_1 = arith.constant 0 : i32
    %c0_i32_2 = arith.constant 0 : i32
    return %c0_i32, %c0_i32_0, %c0_i32_1 : i32, i32, i32
  }
  func.func @transform_4(%arg0: i32) -> (i32, i32) {
    %c0_i32 = arith.constant 0 : i32
    %c0_i32_0 = arith.constant 0 : i32
    %c0_i32_1 = arith.constant 0 : i32
    return %c0_i32, %c0_i32_0 : i32, i32
  }
  func.func @transform_5(%arg0: i32) -> (i32, i32) {
    %c0_i32 = arith.constant 0 : i32
    %c0_i32_0 = arith.constant 0 : i32
    %c0_i32_1 = arith.constant 0 : i32
    return %c0_i32, %c0_i32_0 : i32, i32
  }
  func.func @transform_6(%arg0: i32) -> (i32, i32) {
    %c0_i32 = arith.constant 0 : i32
    %c0_i32_0 = arith.constant 0 : i32
    %c0_i32_1 = arith.constant 0 : i32
    return %c0_i32, %c0_i32_0 : i32, i32
  }
}

</mosaic_0001>

<llo_original>
// kernel: lstm_net_forward.1
$region0: #{lstm_net_forward.1}
  #allocation0 [shape = 'u32[]', space=smem, size = 0x4, offset = 0x4, fixed_abs, tag = 'smem constant byte address 0x4 - core index']
  #allocation1 [shape = 'u32[144,128]{1,0:T(1,128)}', space=vmem, size = 0x12000, scoped, tag = 'internal scratch']
  #allocation2 [shape = 'f32[64,32]{1,0:T(8,128)}', space=vmem, size = 0x8000, scoped, tag = 'scratch operand']
  #allocation3 [shape = 'f32[64,128]{1,0:T(8,128)}', space=vmem, size = 0x8000, scoped, tag = 'scratch operand']
  #allocation4 [shape = 'f32[1,1]{1,0:T(1,128)S(1)}', space=vmem, size = 0x200, scoped, tag = 'scoped memory for lstm_net_forward.1']
  %s0 = inlined_call_operand.vmem [shape: f32[64,128], index: 0, kind: input, shape index: {}]
  %s1 = inlined_call_operand.vmem [shape: bf16[2,32,128], index: 1, kind: input, shape index: {}]
  %s2 = inlined_call_operand.vmem [shape: bf16[1,32,128], index: 2, kind: input, shape index: {}]
  %s3 = inlined_call_operand.vmem [shape: f32[1,1,128], index: 3, kind: input, shape index: {}]
  %s4 = inlined_call_operand.vmem [shape: f32[1,32], index: 4, kind: input, shape index: {}]
  %s5 = inlined_call_operand.<no memory space> [shape: f32[1,1], index: 5, kind: input, shape index: {}]
  %s6 = inlined_call_operand.vmem [shape: f32[2,1], index: 6, kind: output, shape index: {}]
  %s7 = sld [smem:[#allocation0]]
  $region34: #{lstm_net_forward.1} parent=0
    _
  %s9 = ssub.s32 1, %s7
  %s10 = scalar_select 0, %s9, %s7
  %v11 = vstv %s5
  %12 = vst [vmem:[#allocation4] sm:$0x1] %v11
  // Predicated region
  $region2: #{lstm_net_forward.1} parent=0 // pred_check
    _
  $region3: #{lstm_net_forward.1} parent=0 // pred_check_branch
    %14 = sbr.rel (0) target = $region5
  $region4: #{lstm_net_forward.1} parent=0 // pred_region
    _
  $region5: #{lstm_net_forward.1} parent=0 // pred_fallthru
    _
  // Predicated region
  $region6: #{lstm_net_forward.1} parent=0 // pred_check
    _
  $region7: #{lstm_net_forward.1} parent=0 // pred_check_branch
    %16 = sbr.rel (0) target = $region9
  $region8: #{lstm_net_forward.1} parent=0 // pred_region
    _
  $region9: #{lstm_net_forward.1} parent=0 // pred_fallthru
    _
  // Predicated region
  $region10: #{lstm_net_forward.1} parent=0 // pred_check
    _
  $region11: #{lstm_net_forward.1} parent=0 // pred_check_branch
    %18 = sbr.rel (0) target = $region13
  $region12: #{lstm_net_forward.1} parent=0 // pred_region
    _
  $region13: #{lstm_net_forward.1} parent=0 // pred_fallthru
    _
  // Predicated region
  $region14: #{lstm_net_forward.1} parent=0 // pred_check
    _
  $region15: #{lstm_net_forward.1} parent=0 // pred_check_branch
    %20 = sbr.rel (0) target = $region17
  $region16: #{lstm_net_forward.1} parent=0 // pred_region
    _
  $region17: #{lstm_net_forward.1} parent=0 // pred_fallthru
    _
  // Predicated region
  $region18: #{lstm_net_forward.1} parent=0 // pred_check
    _
  $region19: #{lstm_net_forward.1} parent=0 // pred_check_branch
    %22 = sbr.rel (0) target = $region21
  $region20: #{lstm_net_forward.1} parent=0 // pred_region
    _
  $region21: #{lstm_net_forward.1} parent=0 // pred_fallthru
    _
  // Predicated region
  $region22: #{lstm_net_forward.1} parent=0 // pred_check
    _
  $region23: #{lstm_net_forward.1} parent=0 // pred_check_branch
    %24 = sbr.rel (0) target = $region25
  $region24: #{lstm_net_forward.1} parent=0 // pred_region
    _
  $region25: #{lstm_net_forward.1} parent=0 // pred_fallthru
    _
  %v26 = vld [vmem:[%s1] sm:$0xf]
  %v27 = vld [vmem:[%s1 + $0x4] sm:$0xf]
  %v28 = vld [vmem:[%s1 + $0x8] sm:$0xf]
  %v29 = vld [vmem:[%s1 + $0xc] sm:$0xf]
  %v30 = vld [vmem:[%s0] sm:$0xff]
  %v35 = vunpack.c.l.b16 %v26
  %v36 = vunpack.c.l.b16 %v27
  %v37 = vunpack.c.l.b16 %v28
  %v38 = vunpack.c.l.b16 %v29
  %v39 = vpack.c.b16 %v36, %v35
  %v40 = vpack.c.b16 %v38, %v37
  %vm43 = vcmask 261120
  %v45 = vsel %vm43, 0, 0
  %47 = vmatprep.subr.bf16.mxu0 0
  %48 = vmatpush1.bf16.msra.mxu0 0
  %49 = vmatprep.subr.bf16.mxu0 0
  %50 = vmatpush1.bf16.msra.mxu0 0
  %51 = vmatprep.subr.bf16.mxu0 0
  %52 = vmatpush1.bf16.msra.mxu0 0
  %53 = vmatprep.subr.bf16.mxu0 0
  %54 = vmatpush1.bf16.msra.mxu0 0
  %55 = vmatprep.subr.bf16.mxu0 0
  %56 = vmatpush1.bf16.msra.mxu0 0
  %57 = vmatprep.subr.bf16.mxu0 0
  %58 = vmatpush1.bf16.msra.mxu0 0
  %59 = vmatprep.subr.bf16.mxu0 0
  %60 = vmatpush1.bf16.msra.mxu0 %v40
  %61 = vmatprep.subr.bf16.mxu0 0
  %62 = vmatpush1.bf16.msra.mxu0 %v39
  %63 = vmatprep.subr.bf16.mxu0 0
  %64 = vmatpush2.bf16.msra.mxu0 0
  %65 = vmatprep.subr.bf16.mxu0 0
  %66 = vmatpush2.bf16.msra.mxu0 0
  %67 = vmatprep.subr.bf16.mxu0 0
  %68 = vmatpush2.bf16.msra.mxu0 0
  %69 = vmatprep.subr.bf16.mxu0 0
  %70 = vmatpush2.bf16.msra.mxu0 0
  %71 = vmatprep.subr.bf16.mxu0 0
  %72 = vmatpush2.bf16.msra.mxu0 0
  %73 = vmatprep.subr.bf16.mxu0 0
  %74 = vmatpush2.bf16.msra.mxu0 0
  %75 = vmatprep.subr.bf16.mxu0 0
  %76 = vmatpush2.bf16.msra.mxu0 0
  %77 = vmatprep.subr.bf16.mxu0 0
  %78 = vmatpush2.bf16.msra.mxu0 0
  %79 = vmatprep.mubr.bf16.mxu0 0
  %80 = vmatmul.mubr.bf16.gmra.mxu0 %v45
  %v81 = vpop.f32.mrf.mxu0
  %v82 = vadd.f32 0.0, %v81
  %v83 = vpop.f32.mrf.mxu0
  %v84 = vpop.f32.mrf.mxu0
  %v85 = vpop.f32.mrf.mxu0
  %86 = vdwg.mxu0
  %v87 = vadd.f32 %v30, %v82
  %v88 = vxor.u32 %v87, 2147483648
  %v89 = vmul.f32 %v88, 1.442695
  %v90 = vpow.pop %v89
  %v91 = vadd.f32 %v90, 1.0
  %v92 = vrcp.pop %v91
  %v93 = vmul.f32 1.0, %v92
  %v94 = vtanh.pop %v87
  %v95 = vmul.f32 %v93, 0.0
  %97 = vrot.lane.b32.xlu0 %v94, 32
  %v98 = vpop.permute.xlu0 %97
  %v100 = vmul.f32 %v93, %v98
  %102 = vrot.lane.b32.xlu0 %v100, 32
  %v103 = vpop.permute.xlu0 %102
  %v105 = vadd.f32 %v95, %v103
  %v106 = vtanh.pop %v105
  %108 = vrot.lane.b32.xlu0 %v106, 32
  %v109 = vpop.permute.xlu0 %108
  %v111 = vmul.f32 %v93, %v109
  %113 = vrot.lane.b32.xlu0 %v111, 64
  %v114 = vpop.permute.xlu0 %113
  %116 = vst.msk [vmem:[#allocation2] sm:$0xff] %vm43, %v114
  %s117 = scalar_lea.vmem %s0, 8
  %v118 = vld [vmem:[%s117] sm:$0xff]
  %v119 = vpack.c.bf16 %v111, %v111
  %121 = vrot.lane.b32.xlu0 %v119, 64
  %v122 = vpop.permute.xlu0 %121
  %v124 = vsel %vm43, %v122, 0
  %126 = vmatprep.subr.bf16.mxu0 0
  %127 = vmatpush1.bf16.msra.mxu0 0
  %128 = vmatprep.subr.bf16.mxu0 0
  %129 = vmatpush1.bf16.msra.mxu0 0
  %130 = vmatprep.subr.bf16.mxu0 0
  %131 = vmatpush1.bf16.msra.mxu0 0
  %132 = vmatprep.subr.bf16.mxu0 0
  %133 = vmatpush1.bf16.msra.mxu0 0
  %134 = vmatprep.subr.bf16.mxu0 0
  %135 = vmatpush1.bf16.msra.mxu0 0
  %136 = vmatprep.subr.bf16.mxu0 0
  %137 = vmatpush1.bf16.msra.mxu0 0
  %138 = vmatprep.subr.bf16.mxu0 0
  %139 = vmatpush1.bf16.msra.mxu0 %v40
  %140 = vmatprep.subr.bf16.mxu0 0
  %141 = vmatpush1.bf16.msra.mxu0 %v39
  %142 = vmatprep.subr.bf16.mxu0 0
  %143 = vmatpush2.bf16.msra.mxu0 0
  %144 = vmatprep.subr.bf16.mxu0 0
  %145 = vmatpush2.bf16.msra.mxu0 0
  %146 = vmatprep.subr.bf16.mxu0 0
  %147 = vmatpush2.bf16.msra.mxu0 0
  %148 = vmatprep.subr.bf16.mxu0 0
  %149 = vmatpush2.bf16.msra.mxu0 0
  %150 = vmatprep.subr.bf16.mxu0 0
  %151 = vmatpush2.bf16.msra.mxu0 0
  %152 = vmatprep.subr.bf16.mxu0 0
  %153 = vmatpush2.bf16.msra.mxu0 0
  %154 = vmatprep.subr.bf16.mxu0 0
  %155 = vmatpush2.bf16.msra.mxu0 0
  %156 = vmatprep.subr.bf16.mxu0 0
  %157 = vmatpush2.bf16.msra.mxu0 0
  %158 = vmatprep.mubr.bf16.mxu0 0
  %159 = vmatmul.mubr.bf16.gmra.mxu0 %v124
  %v160 = vpop.f32.mrf.mxu0
  %v161 = vadd.f32 0.0, %v160
  %v162 = vpop.f32.mrf.mxu0
  %v163 = vpop.f32.mrf.mxu0
  %v164 = vpop.f32.mrf.mxu0
  %165 = vdwg.mxu0
  %v166 = vadd.f32 %v118, %v161
  %v167 = vxor.u32 %v166, 2147483648
  %v168 = vmul.f32 %v167, 1.442695
  %v169 = vpow.pop %v168
  %v170 = vadd.f32 %v169, 1.0
  %v171 = vrcp.pop %v170
  %v172 = vmul.f32 1.0, %v171
  %v173 = vtanh.pop %v166
  %v174 = vmul.f32 %v172, %v105
  %176 = vrot.lane.b32.xlu0 %v173, 32
  %v177 = vpop.permute.xlu0 %176
  %v179 = vmul.f32 %v172, %v177
  %181 = vrot.lane.b32.xlu0 %v179, 32
  %v182 = vpop.permute.xlu0 %181
  %v184 = vadd.f32 %v174, %v182
  %v185 = vtanh.pop %v184
  %187 = vrot.lane.b32.xlu0 %v185, 32
  %v188 = vpop.permute.xlu0 %187
  %v190 = vmul.f32 %v172, %v188
  %192 = vrot.lane.b32.xlu0 %v190, 64
  %v193 = vpop.permute.xlu0 %192
  %s195 = scalar_lea.vmem [#allocation2], 8
  %196 = vst.msk [vmem:[%s195] sm:$0xff] %vm43, %v193
  %s197 = scalar_lea.vmem %s0, 16
  %v198 = vld [vmem:[%s197] sm:$0xff]
  %v199 = vpack.c.bf16 %v190, %v190
  %201 = vrot.lane.b32.xlu0 %v199, 64
  %v202 = vpop.permute.xlu0 %201
  %v204 = vsel %vm43, %v202, 0
  %206 = vmatprep.subr.bf16.mxu0 0
  %207 = vmatpush1.bf16.msra.mxu0 0
  %208 = vmatprep.subr.bf16.mxu0 0
  %209 = vmatpush1.bf16.msra.mxu0 0
  %210 = vmatprep.subr.bf16.mxu0 0
  %211 = vmatpush1.bf16.msra.mxu0 0
  %212 = vmatprep.subr.bf16.mxu0 0
  %213 = vmatpush1.bf16.msra.mxu0 0
  %214 = vmatprep.subr.bf16.mxu0 0
  %215 = vmatpush1.bf16.msra.mxu0 0
  %216 = vmatprep.subr.bf16.mxu0 0
  %217 = vmatpush1.bf16.msra.mxu0 0
  %218 = vmatprep.subr.bf16.mxu0 0
  %219 = vmatpush1.bf16.msra.mxu0 %v40
  %220 = vmatprep.subr.bf16.mxu0 0
  %221 = vmatpush1.bf16.msra.mxu0 %v39
  %222 = vmatprep.subr.bf16.mxu0 0
  %223 = vmatpush2.bf16.msra.mxu0 0
  %224 = vmatprep.subr.bf16.mxu0 0
  %225 = vmatpush2.bf16.msra.mxu0 0
  %226 = vmatprep.subr.bf16.mxu0 0
  %227 = vmatpush2.bf16.msra.mxu0 0
  %228 = vmatprep.subr.bf16.mxu0 0
  %229 = vmatpush2.bf16.msra.mxu0 0
  %230 = vmatprep.subr.bf16.mxu0 0
  %231 = vmatpush2.bf16.msra.mxu0 0
  %232 = vmatprep.subr.bf16.mxu0 0
  %233 = vmatpush2.bf16.msra.mxu0 0
  %234 = vmatprep.subr.bf16.mxu0 0
  %235 = vmatpush2.bf16.msra.mxu0 0
  %236 = vmatprep.subr.bf16.mxu0 0
  %237 = vmatpush2.bf16.msra.mxu0 0
  %238 = vmatprep.mubr.bf16.mxu0 0
  %239 = vmatmul.mubr.bf16.gmra.mxu0 %v204
  %v240 = vpop.f32.mrf.mxu0
  %v241 = vadd.f32 0.0, %v240
  %v242 = vpop.f32.mrf.mxu0
  %v243 = vpop.f32.mrf.mxu0
  %v244 = vpop.f32.mrf.mxu0
  %245 = vdwg.mxu0
  %v246 = vadd.f32 %v198, %v241
  %v247 = vxor.u32 %v246, 2147483648
  %v248 = vmul.f32 %v247, 1.442695
  %v249 = vpow.pop %v248
  %v250 = vadd.f32 %v249, 1.0
  %v251 = vrcp.pop %v250
  %v252 = vmul.f32 1.0, %v251
  %v253 = vtanh.pop %v246
  %v254 = vmul.f32 %v252, %v184
  %256 = vrot.lane.b32.xlu0 %v253, 32
  %v257 = vpop.permute.xlu0 %256
  %v259 = vmul.f32 %v252, %v257
  %261 = vrot.lane.b32.xlu0 %v259, 32
  %v262 = vpop.permute.xlu0 %261
  %v264 = vadd.f32 %v254, %v262
  %v265 = vtanh.pop %v264
  %267 = vrot.lane.b32.xlu0 %v265, 32
  %v268 = vpop.permute.xlu0 %267
  %v270 = vmul.f32 %v252, %v268
  %272 = vrot.lane.b32.xlu0 %v270, 64
  %v273 = vpop.permute.xlu0 %272
  %s275 = scalar_lea.vmem [#allocation2], 16
  %276 = vst.msk [vmem:[%s275] sm:$0xff] %vm43, %v273
  %s277 = scalar_lea.vmem %s0, 24
  %v278 = vld [vmem:[%s277] sm:$0xff]
  %v279 = vpack.c.bf16 %v270, %v270
  %281 = vrot.lane.b32.xlu0 %v279, 64
  %v282 = vpop.permute.xlu0 %281
  %v284 = vsel %vm43, %v282, 0
  %286 = vmatprep.subr.bf16.mxu0 0
  %287 = vmatpush1.bf16.msra.mxu0 0
  %288 = vmatprep.subr.bf16.mxu0 0
  %289 = vmatpush1.bf16.msra.mxu0 0
  %290 = vmatprep.subr.bf16.mxu0 0
  %291 = vmatpush1.bf16.msra.mxu0 0
  %292 = vmatprep.subr.bf16.mxu0 0
  %293 = vmatpush1.bf16.msra.mxu0 0
  %294 = vmatprep.subr.bf16.mxu0 0
  %295 = vmatpush1.bf16.msra.mxu0 0
  %296 = vmatprep.subr.bf16.mxu0 0
  %297 = vmatpush1.bf16.msra.mxu0 0
  %298 = vmatprep.subr.bf16.mxu0 0
  %299 = vmatpush1.bf16.msra.mxu0 %v40
  %300 = vmatprep.subr.bf16.mxu0 0
  %301 = vmatpush1.bf16.msra.mxu0 %v39
  %302 = vmatprep.subr.bf16.mxu0 0
  %303 = vmatpush2.bf16.msra.mxu0 0
  %304 = vmatprep.subr.bf16.mxu0 0
  %305 = vmatpush2.bf16.msra.mxu0 0
  %306 = vmatprep.subr.bf16.mxu0 0
  %307 = vmatpush2.bf16.msra.mxu0 0
  %308 = vmatprep.subr.bf16.mxu0 0
  %309 = vmatpush2.bf16.msra.mxu0 0
  %310 = vmatprep.subr.bf16.mxu0 0
  %311 = vmatpush2.bf16.msra.mxu0 0
  %312 = vmatprep.subr.bf16.mxu0 0
  %313 = vmatpush2.bf16.msra.mxu0 0
  %314 = vmatprep.subr.bf16.mxu0 0
  %315 = vmatpush2.bf16.msra.mxu0 0
  %316 = vmatprep.subr.bf16.mxu0 0
  %317 = vmatpush2.bf16.msra.mxu0 0
  %318 = vmatprep.mubr.bf16.mxu0 0
  %319 = vmatmul.mubr.bf16.gmra.mxu0 %v284
  %v320 = vpop.f32.mrf.mxu0
  %v321 = vadd.f32 0.0, %v320
  %v322 = vpop.f32.mrf.mxu0
  %v323 = vpop.f32.mrf.mxu0
  %v324 = vpop.f32.mrf.mxu0
  %325 = vdwg.mxu0
  %v326 = vadd.f32 %v278, %v321
  %v327 = vxor.u32 %v326, 2147483648
  %v328 = vmul.f32 %v327, 1.442695
  %v329 = vpow.pop %v328
  %v330 = vadd.f32 %v329, 1.0
  %v331 = vrcp.pop %v330
  %v332 = vmul.f32 1.0, %v331
  %v333 = vtanh.pop %v326
  %v334 = vmul.f32 %v332, %v264
  %336 = vrot.lane.b32.xlu0 %v333, 32
  %v337 = vpop.permute.xlu0 %336
  %v339 = vmul.f32 %v332, %v337
  %341 = vrot.lane.b32.xlu0 %v339, 32
  %v342 = vpop.permute.xlu0 %341
  %v344 = vadd.f32 %v334, %v342
  %v345 = vtanh.pop %v344
  %347 = vrot.lane.b32.xlu0 %v345, 32
  %v348 = vpop.permute.xlu0 %347
  %v350 = vmul.f32 %v332, %v348
  %352 = vrot.lane.b32.xlu0 %v350, 64
  %v353 = vpop.permute.xlu0 %352
  %s355 = scalar_lea.vmem [#allocation2], 24
  %356 = vst.msk [vmem:[%s355] sm:$0xff] %vm43, %v353
  %s357 = scalar_lea.vmem %s0, 32
  %v358 = vld [vmem:[%s357] sm:$0xff]
  %v359 = vpack.c.bf16 %v350, %v350
  %361 = vrot.lane.b32.xlu0 %v359, 64
  %v362 = vpop.permute.xlu0 %361
  %v364 = vsel %vm43, %v362, 0
  %366 = vmatprep.subr.bf16.mxu0 0
  %367 = vmatpush1.bf16.msra.mxu0 0
  %368 = vmatprep.subr.bf16.mxu0 0
  %369 = vmatpush1.bf16.msra.mxu0 0
  %370 = vmatprep.subr.bf16.mxu0 0
  %371 = vmatpush1.bf16.msra.mxu0 0
  %372 = vmatprep.subr.bf16.mxu0 0
  %373 = vmatpush1.bf16.msra.mxu0 0
  %374 = vmatprep.subr.bf16.mxu0 0
  %375 = vmatpush1.bf16.msra.mxu0 0
  %376 = vmatprep.subr.bf16.mxu0 0
  %377 = vmatpush1.bf16.msra.mxu0 0
  %378 = vmatprep.subr.bf16.mxu0 0
  %379 = vmatpush1.bf16.msra.mxu0 %v40
  %380 = vmatprep.subr.bf16.mxu0 0
  %381 = vmatpush1.bf16.msra.mxu0 %v39
  %382 = vmatprep.subr.bf16.mxu0 0
  %383 = vmatpush2.bf16.msra.mxu0 0
  %384 = vmatprep.subr.bf16.mxu0 0
  %385 = vmatpush2.bf16.msra.mxu0 0
  %386 = vmatprep.subr.bf16.mxu0 0
  %387 = vmatpush2.bf16.msra.mxu0 0
  %388 = vmatprep.subr.bf16.mxu0 0
  %389 = vmatpush2.bf16.msra.mxu0 0
  %390 = vmatprep.subr.bf16.mxu0 0
  %391 = vmatpush2.bf16.msra.mxu0 0
  %392 = vmatprep.subr.bf16.mxu0 0
  %393 = vmatpush2.bf16.msra.mxu0 0
  %394 = vmatprep.subr.bf16.mxu0 0
  %395 = vmatpush2.bf16.msra.mxu0 0
  %396 = vmatprep.subr.bf16.mxu0 0
  %397 = vmatpush2.bf16.msra.mxu0 0
  %398 = vmatprep.mubr.bf16.mxu0 0
  %399 = vmatmul.mubr.bf16.gmra.mxu0 %v364
  %v400 = vpop.f32.mrf.mxu0
  %v401 = vadd.f32 0.0, %v400
  %v402 = vpop.f32.mrf.mxu0
  %v403 = vpop.f32.mrf.mxu0
  %v404 = vpop.f32.mrf.mxu0
  %405 = vdwg.mxu0
  %v406 = vadd.f32 %v358, %v401
  %v407 = vxor.u32 %v406, 2147483648
  %v408 = vmul.f32 %v407, 1.442695
  %v409 = vpow.pop %v408
  %v410 = vadd.f32 %v409, 1.0
  %v411 = vrcp.pop %v410
  %v412 = vmul.f32 1.0, %v411
  %v413 = vtanh.pop %v406
  %v414 = vmul.f32 %v412, %v344
  %416 = vrot.lane.b32.xlu0 %v413, 32
  %v417 = vpop.permute.xlu0 %416
  %v419 = vmul.f32 %v412, %v417
  %421 = vrot.lane.b32.xlu0 %v419, 32
  %v422 = vpop.permute.xlu0 %421
  %v424 = vadd.f32 %v414, %v422
  %v425 = vtanh.pop %v424
  %427 = vrot.lane.b32.xlu0 %v425, 32
  %v428 = vpop.permute.xlu0 %427
  %v430 = vmul.f32 %v412, %v428
  %432 = vrot.lane.b32.xlu0 %v430, 64
  %v433 = vpop.permute.xlu0 %432
  %s435 = scalar_lea.vmem [#allocation2], 32
  %436 = vst.msk [vmem:[%s435] sm:$0xff] %vm43, %v433
  %s437 = scalar_lea.vmem %s0, 40
  %v438 = vld [vmem:[%s437] sm:$0xff]
  %v439 = vpack.c.bf16 %v430, %v430
  %441 = vrot.lane.b32.xlu0 %v439, 64
  %v442 = vpop.permute.xlu0 %441
  %v444 = vsel %vm43, %v442, 0
  %446 = vmatprep.subr.bf16.mxu0 0
  %447 = vmatpush1.bf16.msra.mxu0 0
  %448 = vmatprep.subr.bf16.mxu0 0
  %449 = vmatpush1.bf16.msra.mxu0 0
  %450 = vmatprep.subr.bf16.mxu0 0
  %451 = vmatpush1.bf16.msra.mxu0 0
  %452 = vmatprep.subr.bf16.mxu0 0
  %453 = vmatpush1.bf16.msra.mxu0 0
  %454 = vmatprep.subr.bf16.mxu0 0
  %455 = vmatpush1.bf16.msra.mxu0 0
  %456 = vmatprep.subr.bf16.mxu0 0
  %457 = vmatpush1.bf16.msra.mxu0 0
  %458 = vmatprep.subr.bf16.mxu0 0
  %459 = vmatpush1.bf16.msra.mxu0 %v40
  %460 = vmatprep.subr.bf16.mxu0 0
  %461 = vmatpush1.bf16.msra.mxu0 %v39
  %462 = vmatprep.subr.bf16.mxu0 0
  %463 = vmatpush2.bf16.msra.mxu0 0
  %464 = vmatprep.subr.bf16.mxu0 0
  %465 = vmatpush2.bf16.msra.mxu0 0
  %466 = vmatprep.subr.bf16.mxu0 0
  %467 = vmatpush2.bf16.msra.mxu0 0
  %468 = vmatprep.subr.bf16.mxu0 0
  %469 = vmatpush2.bf16.msra.mxu0 0
  %470 = vmatprep.subr.bf16.mxu0 0
  %471 = vmatpush2.bf16.msra.mxu0 0
  %472 = vmatprep.subr.bf16.mxu0 0
  %473 = vmatpush2.bf16.msra.mxu0 0
  %474 = vmatprep.subr.bf16.mxu0 0
  %475 = vmatpush2.bf16.msra.mxu0 0
  %476 = vmatprep.subr.bf16.mxu0 0
  %477 = vmatpush2.bf16.msra.mxu0 0
  %478 = vmatprep.mubr.bf16.mxu0 0
  %479 = vmatmul.mubr.bf16.gmra.mxu0 %v444
  %v480 = vpop.f32.mrf.mxu0
  %v481 = vadd.f32 0.0, %v480
  %v482 = vpop.f32.mrf.mxu0
  %v483 = vpop.f32.mrf.mxu0
  %v484 = vpop.f32.mrf.mxu0
  %485 = vdwg.mxu0
  %v486 = vadd.f32 %v438, %v481
  %v487 = vxor.u32 %v486, 2147483648
  %v488 = vmul.f32 %v487, 1.442695
  %v489 = vpow.pop %v488
  %v490 = vadd.f32 %v489, 1.0
  %v491 = vrcp.pop %v490
  %v492 = vmul.f32 1.0, %v491
  %v493 = vtanh.pop %v486
  %v494 = vmul.f32 %v492, %v424
  %496 = vrot.lane.b32.xlu0 %v493, 32
  %v497 = vpop.permute.xlu0 %496
  %v499 = vmul.f32 %v492, %v497
  %501 = vrot.lane.b32.xlu0 %v499, 32
  %v502 = vpop.permute.xlu0 %501
  %v504 = vadd.f32 %v494, %v502
  %v505 = vtanh.pop %v504
  %507 = vrot.lane.b32.xlu0 %v505, 32
  %v508 = vpop.permute.xlu0 %507
  %v510 = vmul.f32 %v492, %v508
  %512 = vrot.lane.b32.xlu0 %v510, 64
  %v513 = vpop.permute.xlu0 %512
  %s515 = scalar_lea.vmem [#allocation2], 40
  %516 = vst.msk [vmem:[%s515] sm:$0xff] %vm43, %v513
  %s517 = scalar_lea.vmem %s0, 48
  %v518 = vld [vmem:[%s517] sm:$0xff]
  %v519 = vpack.c.bf16 %v510, %v510
  %521 = vrot.lane.b32.xlu0 %v519, 64
  %v522 = vpop.permute.xlu0 %521
  %v524 = vsel %vm43, %v522, 0
  %526 = vmatprep.subr.bf16.mxu0 0
  %527 = vmatpush1.bf16.msra.mxu0 0
  %528 = vmatprep.subr.bf16.mxu0 0
  %529 = vmatpush1.bf16.msra.mxu0 0
  %530 = vmatprep.subr.bf16.mxu0 0
  %531 = vmatpush1.bf16.msra.mxu0 0
  %532 = vmatprep.subr.bf16.mxu0 0
  %533 = vmatpush1.bf16.msra.mxu0 0
  %534 = vmatprep.subr.bf16.mxu0 0
  %535 = vmatpush1.bf16.msra.mxu0 0
  %536 = vmatprep.subr.bf16.mxu0 0
  %537 = vmatpush1.bf16.msra.mxu0 0
  %538 = vmatprep.subr.bf16.mxu0 0
  %539 = vmatpush1.bf16.msra.mxu0 %v40
  %540 = vmatprep.subr.bf16.mxu0 0
  %541 = vmatpush1.bf16.msra.mxu0 %v39
  %542 = vmatprep.subr.bf16.mxu0 0
  %543 = vmatpush2.bf16.msra.mxu0 0
  %544 = vmatprep.subr.bf16.mxu0 0
  %545 = vmatpush2.bf16.msra.mxu0 0
  %546 = vmatprep.subr.bf16.mxu0 0
  %547 = vmatpush2.bf16.msra.mxu0 0
  %548 = vmatprep.subr.bf16.mxu0 0
  %549 = vmatpush2.bf16.msra.mxu0 0
  %550 = vmatprep.subr.bf16.mxu0 0
  %551 = vmatpush2.bf16.msra.mxu0 0
  %552 = vmatprep.subr.bf16.mxu0 0
  %553 = vmatpush2.bf16.msra.mxu0 0
  %554 = vmatprep.subr.bf16.mxu0 0
  %555 = vmatpush2.bf16.msra.mxu0 0
  %556 = vmatprep.subr.bf16.mxu0 0
  %557 = vmatpush2.bf16.msra.mxu0 0
  %558 = vmatprep.mubr.bf16.mxu0 0
  %559 = vmatmul.mubr.bf16.gmra.mxu0 %v524
  %v560 = vpop.f32.mrf.mxu0
  %v561 = vadd.f32 0.0, %v560
  %v562 = vpop.f32.mrf.mxu0
  %v563 = vpop.f32.mrf.mxu0
  %v564 = vpop.f32.mrf.mxu0
  %565 = vdwg.mxu0
  %v566 = vadd.f32 %v518, %v561
  %v567 = vxor.u32 %v566, 2147483648
  %v568 = vmul.f32 %v567, 1.442695
  %v569 = vpow.pop %v568
  %v570 = vadd.f32 %v569, 1.0
  %v571 = vrcp.pop %v570
  %v572 = vmul.f32 1.0, %v571
  %v573 = vtanh.pop %v566
  %v574 = vmul.f32 %v572, %v504
  %576 = vrot.lane.b32.xlu0 %v573, 32
  %v577 = vpop.permute.xlu0 %576
  %v579 = vmul.f32 %v572, %v577
  %581 = vrot.lane.b32.xlu0 %v579, 32
  %v582 = vpop.permute.xlu0 %581
  %v584 = vadd.f32 %v574, %v582
  %v585 = vtanh.pop %v584
  %587 = vrot.lane.b32.xlu0 %v585, 32
  %v588 = vpop.permute.xlu0 %587
  %v590 = vmul.f32 %v572, %v588
  %592 = vrot.lane.b32.xlu0 %v590, 64
  %v593 = vpop.permute.xlu0 %592
  %s595 = scalar_lea.vmem [#allocation2], 48
  %596 = vst.msk [vmem:[%s595] sm:$0xff] %vm43, %v593
  %s597 = scalar_lea.vmem %s0, 56
  %v598 = vld [vmem:[%s597] sm:$0xff]
  %v599 = vpack.c.bf16 %v590, %v590
  %601 = vrot.lane.b32.xlu0 %v599, 64
  %v602 = vpop.permute.xlu0 %601
  %v604 = vsel %vm43, %v602, 0
  %606 = vmatprep.subr.bf16.mxu0 0
  %607 = vmatpush1.bf16.msra.mxu0 0
  %608 = vmatprep.subr.bf16.mxu0 0
  %609 = vmatpush1.bf16.msra.mxu0 0
  %610 = vmatprep.subr.bf16.mxu0 0
  %611 = vmatpush1.bf16.msra.mxu0 0
  %612 = vmatprep.subr.bf16.mxu0 0
  %613 = vmatpush1.bf16.msra.mxu0 0
  %614 = vmatprep.subr.bf16.mxu0 0
  %615 = vmatpush1.bf16.msra.mxu0 0
  %616 = vmatprep.subr.bf16.mxu0 0
  %617 = vmatpush1.bf16.msra.mxu0 0
  %618 = vmatprep.subr.bf16.mxu0 0
  %619 = vmatpush1.bf16.msra.mxu0 %v40
  %620 = vmatprep.subr.bf16.mxu0 0
  %621 = vmatpush1.bf16.msra.mxu0 %v39
  %622 = vmatprep.subr.bf16.mxu0 0
  %623 = vmatpush2.bf16.msra.mxu0 0
  %624 = vmatprep.subr.bf16.mxu0 0
  %625 = vmatpush2.bf16.msra.mxu0 0
  %626 = vmatprep.subr.bf16.mxu0 0
  %627 = vmatpush2.bf16.msra.mxu0 0
  %628 = vmatprep.subr.bf16.mxu0 0
  %629 = vmatpush2.bf16.msra.mxu0 0
  %630 = vmatprep.subr.bf16.mxu0 0
  %631 = vmatpush2.bf16.msra.mxu0 0
  %632 = vmatprep.subr.bf16.mxu0 0
  %633 = vmatpush2.bf16.msra.mxu0 0
  %634 = vmatprep.subr.bf16.mxu0 0
  %635 = vmatpush2.bf16.msra.mxu0 0
  %636 = vmatprep.subr.bf16.mxu0 0
  %637 = vmatpush2.bf16.msra.mxu0 0
  %638 = vmatprep.mubr.bf16.mxu0 0
  %639 = vmatmul.mubr.bf16.gmra.mxu0 %v604
  %v640 = vpop.f32.mrf.mxu0
  %v641 = vadd.f32 0.0, %v640
  %v642 = vpop.f32.mrf.mxu0
  %v643 = vpop.f32.mrf.mxu0
  %v644 = vpop.f32.mrf.mxu0
  %645 = vdwg.mxu0
  %v646 = vadd.f32 %v598, %v641
  %v647 = vxor.u32 %v646, 2147483648
  %v648 = vmul.f32 %v647, 1.442695
  %v649 = vpow.pop %v648
  %v650 = vadd.f32 %v649, 1.0
  %v651 = vrcp.pop %v650
  %v652 = vmul.f32 1.0, %v651
  %v653 = vtanh.pop %v646
  %v654 = vmul.f32 %v652, %v584
  %656 = vrot.lane.b32.xlu0 %v653, 32
  %v657 = vpop.permute.xlu0 %656
  %v659 = vmul.f32 %v652, %v657
  %661 = vrot.lane.b32.xlu0 %v659, 32
  %v662 = vpop.permute.xlu0 %661
  %v664 = vadd.f32 %v654, %v662
  %v665 = vtanh.pop %v664
  %667 = vrot.lane.b32.xlu0 %v665, 32
  %v668 = vpop.permute.xlu0 %667
  %v670 = vmul.f32 %v652, %v668
  %672 = vrot.lane.b32.xlu0 %v670, 64
  %v673 = vpop.permute.xlu0 %672
  %s675 = scalar_lea.vmem [#allocation2], 56
  %676 = vst.msk [vmem:[%s675] sm:$0xff] %vm43, %v673
  %v677 = vld [vmem:[%s2] sm:$0xf]
  %v678 = vld [vmem:[%s2 + $0x4] sm:$0xf]
  %v679 = vld [vmem:[%s2 + $0x8] sm:$0xf]
  %v680 = vld [vmem:[%s2 + $0xc] sm:$0xf]
  %s681 = scalar_lea.vmem %s1, 16
  %v682 = vld [vmem:[%s681] sm:$0xf]
  %v683 = vld [vmem:[%s681 + $0x4] sm:$0xf]
  %v684 = vld [vmem:[%s681 + $0x8] sm:$0xf]
  %v685 = vld [vmem:[%s681 + $0xc] sm:$0xf]
  %v686 = vld [vmem:[%s3] sm:$0x1]
  %v687 = vld [vmem:[#allocation2] sm:$0xff]
  %v688 = vld [vmem:[#allocation2 + $0x8] sm:$0xff]
  %v689 = vld [vmem:[#allocation2 + $0x10] sm:$0xff]
  %v690 = vld [vmem:[#allocation2 + $0x18] sm:$0xff]
  %v691 = vld [vmem:[#allocation2 + $0x20] sm:$0xff]
  %v692 = vld [vmem:[#allocation2 + $0x28] sm:$0xff]
  %v693 = vld [vmem:[#allocation2 + $0x30] sm:$0xff]
  %v694 = vld [vmem:[#allocation2 + $0x38] sm:$0xff]
  %v695 = vpack.c.bf16 %v688, %v687
  %v696 = vpack.c.bf16 %v690, %v689
  %v697 = vpack.c.bf16 %v692, %v691
  %v698 = vpack.c.bf16 %v694, %v693
  %v700 = vlaneseq
  %v701 = vshrl.u32 %v700, 7
  %v702 = vsub.s32 0, %v701
  %v703 = vrot.slane %v686, %v702
  %v709 = vunpack.c.l.b16 %v677
  %v710 = vunpack.c.l.b16 %v678
  %v711 = vunpack.c.l.b16 %v679
  %v712 = vunpack.c.l.b16 %v680
  %v713 = vpack.c.b16 %v710, %v709
  %v714 = vpack.c.b16 %v712, %v711
  %v718 = vsel %vm43, %v695, 0
  %v721 = vsel %vm43, %v696, 0
  %v724 = vsel %vm43, %v697, 0
  %v727 = vsel %vm43, %v698, 0
  %729 = vmatprep.subr.bf16.mxu0 0
  %730 = vmatpush1.bf16.msra.mxu0 0
  %731 = vmatprep.subr.bf16.mxu0 0
  %732 = vmatpush1.bf16.msra.mxu0 0
  %733 = vmatprep.subr.bf16.mxu0 0
  %734 = vmatpush1.bf16.msra.mxu0 0
  %735 = vmatprep.subr.bf16.mxu0 0
  %736 = vmatpush1.bf16.msra.mxu0 0
  %737 = vmatprep.subr.bf16.mxu0 0
  %738 = vmatpush1.bf16.msra.mxu0 0
  %739 = vmatprep.subr.bf16.mxu0 0
  %740 = vmatpush1.bf16.msra.mxu0 0
  %741 = vmatprep.subr.bf16.mxu0 0
  %742 = vmatpush1.bf16.msra.mxu0 %v714
  %743 = vmatprep.subr.bf16.mxu0 0
  %744 = vmatpush1.bf16.msra.mxu0 %v713
  %745 = vmatprep.subr.bf16.mxu0 0
  %746 = vmatpush2.bf16.msra.mxu0 0
  %747 = vmatprep.subr.bf16.mxu0 0
  %748 = vmatpush2.bf16.msra.mxu0 0
  %749 = vmatprep.subr.bf16.mxu0 0
  %750 = vmatpush2.bf16.msra.mxu0 0
  %751 = vmatprep.subr.bf16.mxu0 0
  %752 = vmatpush2.bf16.msra.mxu0 0
  %753 = vmatprep.subr.bf16.mxu0 0
  %754 = vmatpush2.bf16.msra.mxu0 0
  %755 = vmatprep.subr.bf16.mxu0 0
  %756 = vmatpush2.bf16.msra.mxu0 0
  %757 = vmatprep.subr.bf16.mxu0 0
  %758 = vmatpush2.bf16.msra.mxu0 0
  %759 = vmatprep.subr.bf16.mxu0 0
  %760 = vmatpush2.bf16.msra.mxu0 0
  %761 = vmatprep.mubr.bf16.mxu0 0
  %762 = vmatmul.mubr.bf16.gmra.mxu0 %v718
  %v763 = vpop.f32.mrf.mxu0
  %v764 = vadd.f32 %v703, %v763
  %v765 = vpop.f32.mrf.mxu0
  %v766 = vpop.f32.mrf.mxu0
  %v767 = vadd.f32 %v703, %v766
  %v768 = vpop.f32.mrf.mxu0
  %769 = vmatprep.mubr.bf16.mxu0 0
  %770 = vmatmul.mubr.bf16.gmra.mxu0 %v721
  %v771 = vpop.f32.mrf.mxu0
  %v772 = vadd.f32 %v703, %v771
  %v773 = vpop.f32.mrf.mxu0
  %v774 = vpop.f32.mrf.mxu0
  %v775 = vadd.f32 %v703, %v774
  %v776 = vpop.f32.mrf.mxu0
  %777 = vmatprep.mubr.bf16.mxu0 0
  %778 = vmatmul.mubr.bf16.gmra.mxu0 %v724
  %v779 = vpop.f32.mrf.mxu0
  %v780 = vadd.f32 %v703, %v779
  %v781 = vpop.f32.mrf.mxu0
  %v782 = vpop.f32.mrf.mxu0
  %v783 = vadd.f32 %v703, %v782
  %v784 = vpop.f32.mrf.mxu0
  %785 = vmatprep.mubr.bf16.mxu0 0
  %786 = vmatmul.mubr.bf16.gmra.mxu0 %v727
  %v787 = vpop.f32.mrf.mxu0
  %v788 = vadd.f32 %v703, %v787
  %v789 = vpop.f32.mrf.mxu0
  %v790 = vpop.f32.mrf.mxu0
  %v791 = vadd.f32 %v703, %v790
  %v792 = vpop.f32.mrf.mxu0
  %793 = vdwg.mxu0
  %794 = vst [vmem:[#allocation3] sm:$0xff] %v764
  %795 = vst [vmem:[#allocation3 + $0x8] sm:$0xff] %v767
  %796 = vst [vmem:[#allocation3 + $0x10] sm:$0xff] %v772
  %797 = vst [vmem:[#allocation3 + $0x18] sm:$0xff] %v775
  %798 = vst [vmem:[#allocation3 + $0x20] sm:$0xff] %v780
  %799 = vst [vmem:[#allocation3 + $0x28] sm:$0xff] %v783
  %800 = vst [vmem:[#allocation3 + $0x30] sm:$0xff] %v788
  %801 = vst [vmem:[#allocation3 + $0x38] sm:$0xff] %v791
  %v802 = vld [vmem:[#allocation3] sm:$0xff]
  %v807 = vunpack.c.l.b16 %v682
  %v808 = vunpack.c.l.b16 %v683
  %v809 = vunpack.c.l.b16 %v684
  %v810 = vunpack.c.l.b16 %v685
  %v811 = vpack.c.b16 %v808, %v807
  %v812 = vpack.c.b16 %v810, %v809
  %815 = vmatprep.subr.bf16.mxu0 0
  %816 = vmatpush1.bf16.msra.mxu0 0
  %817 = vmatprep.subr.bf16.mxu0 0
  %818 = vmatpush1.bf16.msra.mxu0 0
  %819 = vmatprep.subr.bf16.mxu0 0
  %820 = vmatpush1.bf16.msra.mxu0 0
  %821 = vmatprep.subr.bf16.mxu0 0
  %822 = vmatpush1.bf16.msra.mxu0 0
  %823 = vmatprep.subr.bf16.mxu0 0
  %824 = vmatpush1.bf16.msra.mxu0 0
  %825 = vmatprep.subr.bf16.mxu0 0
  %826 = vmatpush1.bf16.msra.mxu0 0
  %827 = vmatprep.subr.bf16.mxu0 0
  %828 = vmatpush1.bf16.msra.mxu0 %v812
  %829 = vmatprep.subr.bf16.mxu0 0
  %830 = vmatpush1.bf16.msra.mxu0 %v811
  %831 = vmatprep.subr.bf16.mxu0 0
  %832 = vmatpush2.bf16.msra.mxu0 0
  %833 = vmatprep.subr.bf16.mxu0 0
  %834 = vmatpush2.bf16.msra.mxu0 0
  %835 = vmatprep.subr.bf16.mxu0 0
  %836 = vmatpush2.bf16.msra.mxu0 0
  %837 = vmatprep.subr.bf16.mxu0 0
  %838 = vmatpush2.bf16.msra.mxu0 0
  %839 = vmatprep.subr.bf16.mxu0 0
  %840 = vmatpush2.bf16.msra.mxu0 0
  %841 = vmatprep.subr.bf16.mxu0 0
  %842 = vmatpush2.bf16.msra.mxu0 0
  %843 = vmatprep.subr.bf16.mxu0 0
  %844 = vmatpush2.bf16.msra.mxu0 0
  %845 = vmatprep.subr.bf16.mxu0 0
  %846 = vmatpush2.bf16.msra.mxu0 0
  %847 = vmatprep.mubr.bf16.mxu0 0
  %848 = vmatmul.mubr.bf16.gmra.mxu0 %v45
  %v849 = vpop.f32.mrf.mxu0
  %v850 = vadd.f32 0.0, %v849
  %v851 = vpop.f32.mrf.mxu0
  %v852 = vpop.f32.mrf.mxu0
  %v853 = vpop.f32.mrf.mxu0
  %854 = vdwg.mxu0
  %v855 = vadd.f32 %v802, %v850
  %v856 = vxor.u32 %v855, 2147483648
  %v857 = vmul.f32 %v856, 1.442695
  %v858 = vpow.pop %v857
  %v859 = vadd.f32 %v858, 1.0
  %v860 = vrcp.pop %v859
  %v861 = vmul.f32 1.0, %v860
  %v862 = vtanh.pop %v855
  %v863 = vmul.f32 %v861, 0.0
  %865 = vrot.lane.b32.xlu0 %v862, 32
  %v866 = vpop.permute.xlu0 %865
  %v868 = vmul.f32 %v861, %v866
  %870 = vrot.lane.b32.xlu0 %v868, 32
  %v871 = vpop.permute.xlu0 %870
  %v873 = vadd.f32 %v863, %v871
  %v874 = vtanh.pop %v873
  %876 = vrot.lane.b32.xlu0 %v874, 32
  %v877 = vpop.permute.xlu0 %876
  %v879 = vmul.f32 %v861, %v877
  %s880 = scalar_lea.vmem [#allocation3], 8
  %v881 = vld [vmem:[%s880] sm:$0xff]
  %v882 = vpack.c.bf16 %v879, %v879
  %884 = vrot.lane.b32.xlu0 %v882, 64
  %v885 = vpop.permute.xlu0 %884
  %v887 = vsel %vm43, %v885, 0
  %889 = vmatprep.subr.bf16.mxu0 0
  %890 = vmatpush1.bf16.msra.mxu0 0
  %891 = vmatprep.subr.bf16.mxu0 0
  %892 = vmatpush1.bf16.msra.mxu0 0
  %893 = vmatprep.subr.bf16.mxu0 0
  %894 = vmatpush1.bf16.msra.mxu0 0
  %895 = vmatprep.subr.bf16.mxu0 0
  %896 = vmatpush1.bf16.msra.mxu0 0
  %897 = vmatprep.subr.bf16.mxu0 0
  %898 = vmatpush1.bf16.msra.mxu0 0
  %899 = vmatprep.subr.bf16.mxu0 0
  %900 = vmatpush1.bf16.msra.mxu0 0
  %901 = vmatprep.subr.bf16.mxu0 0
  %902 = vmatpush1.bf16.msra.mxu0 %v812
  %903 = vmatprep.subr.bf16.mxu0 0
  %904 = vmatpush1.bf16.msra.mxu0 %v811
  %905 = vmatprep.subr.bf16.mxu0 0
  %906 = vmatpush2.bf16.msra.mxu0 0
  %907 = vmatprep.subr.bf16.mxu0 0
  %908 = vmatpush2.bf16.msra.mxu0 0
  %909 = vmatprep.subr.bf16.mxu0 0
  %910 = vmatpush2.bf16.msra.mxu0 0
  %911 = vmatprep.subr.bf16.mxu0 0
  %912 = vmatpush2.bf16.msra.mxu0 0
  %913 = vmatprep.subr.bf16.mxu0 0
  %914 = vmatpush2.bf16.msra.mxu0 0
  %915 = vmatprep.subr.bf16.mxu0 0
  %916 = vmatpush2.bf16.msra.mxu0 0
  %917 = vmatprep.subr.bf16.mxu0 0
  %918 = vmatpush2.bf16.msra.mxu0 0
  %919 = vmatprep.subr.bf16.mxu0 0
  %920 = vmatpush2.bf16.msra.mxu0 0
  %921 = vmatprep.mubr.bf16.mxu0 0
  %922 = vmatmul.mubr.bf16.gmra.mxu0 %v887
  %v923 = vpop.f32.mrf.mxu0
  %v924 = vadd.f32 0.0, %v923
  %v925 = vpop.f32.mrf.mxu0
  %v926 = vpop.f32.mrf.mxu0
  %v927 = vpop.f32.mrf.mxu0
  %928 = vdwg.mxu0
  %v929 = vadd.f32 %v881, %v924
  %v930 = vxor.u32 %v929, 2147483648
  %v931 = vmul.f32 %v930, 1.442695
  %v932 = vpow.pop %v931
  %v933 = vadd.f32 %v932, 1.0
  %v934 = vrcp.pop %v933
  %v935 = vmul.f32 1.0, %v934
  %v936 = vtanh.pop %v929
  %v937 = vmul.f32 %v935, %v873
  %939 = vrot.lane.b32.xlu0 %v936, 32
  %v940 = vpop.permute.xlu0 %939
  %v942 = vmul.f32 %v935, %v940
  %944 = vrot.lane.b32.xlu0 %v942, 32
  %v945 = vpop.permute.xlu0 %944
  %v947 = vadd.f32 %v937, %v945
  %v948 = vtanh.pop %v947
  %950 = vrot.lane.b32.xlu0 %v948, 32
  %v951 = vpop.permute.xlu0 %950
  %v953 = vmul.f32 %v935, %v951
  %s954 = scalar_lea.vmem [#allocation3], 16
  %v955 = vld [vmem:[%s954] sm:$0xff]
  %v956 = vpack.c.bf16 %v953, %v953
  %958 = vrot.lane.b32.xlu0 %v956, 64
  %v959 = vpop.permute.xlu0 %958
  %v961 = vsel %vm43, %v959, 0
  %963 = vmatprep.subr.bf16.mxu0 0
  %964 = vmatpush1.bf16.msra.mxu0 0
  %965 = vmatprep.subr.bf16.mxu0 0
  %966 = vmatpush1.bf16.msra.mxu0 0
  %967 = vmatprep.subr.bf16.mxu0 0
  %968 = vmatpush1.bf16.msra.mxu0 0
  %969 = vmatprep.subr.bf16.mxu0 0
  %970 = vmatpush1.bf16.msra.mxu0 0
  %971 = vmatprep.subr.bf16.mxu0 0
  %972 = vmatpush1.bf16.msra.mxu0 0
  %973 = vmatprep.subr.bf16.mxu0 0
  %974 = vmatpush1.bf16.msra.mxu0 0
  %975 = vmatprep.subr.bf16.mxu0 0
  %976 = vmatpush1.bf16.msra.mxu0 %v812
  %977 = vmatprep.subr.bf16.mxu0 0
  %978 = vmatpush1.bf16.msra.mxu0 %v811
  %979 = vmatprep.subr.bf16.mxu0 0
  %980 = vmatpush2.bf16.msra.mxu0 0
  %981 = vmatprep.subr.bf16.mxu0 0
  %982 = vmatpush2.bf16.msra.mxu0 0
  %983 = vmatprep.subr.bf16.mxu0 0
  %984 = vmatpush2.bf16.msra.mxu0 0
  %985 = vmatprep.subr.bf16.mxu0 0
  %986 = vmatpush2.bf16.msra.mxu0 0
  %987 = vmatprep.subr.bf16.mxu0 0
  %988 = vmatpush2.bf16.msra.mxu0 0
  %989 = vmatprep.subr.bf16.mxu0 0
  %990 = vmatpush2.bf16.msra.mxu0 0
  %991 = vmatprep.subr.bf16.mxu0 0
  %992 = vmatpush2.bf16.msra.mxu0 0
  %993 = vmatprep.subr.bf16.mxu0 0
  %994 = vmatpush2.bf16.msra.mxu0 0
  %995 = vmatprep.mubr.bf16.mxu0 0
  %996 = vmatmul.mubr.bf16.gmra.mxu0 %v961
  %v997 = vpop.f32.mrf.mxu0
  %v998 = vadd.f32 0.0, %v997
  %v999 = vpop.f32.mrf.mxu0
  %v1000 = vpop.f32.mrf.mxu0
  %v1001 = vpop.f32.mrf.mxu0
  %1002 = vdwg.mxu0
  %v1003 = vadd.f32 %v955, %v998
  %v1004 = vxor.u32 %v1003, 2147483648
  %v1005 = vmul.f32 %v1004, 1.442695
  %v1006 = vpow.pop %v1005
  %v1007 = vadd.f32 %v1006, 1.0
  %v1008 = vrcp.pop %v1007
  %v1009 = vmul.f32 1.0, %v1008
  %v1010 = vtanh.pop %v1003
  %v1011 = vmul.f32 %v1009, %v947
  %1013 = vrot.lane.b32.xlu0 %v1010, 32
  %v1014 = vpop.permute.xlu0 %1013
  %v1016 = vmul.f32 %v1009, %v1014
  %1018 = vrot.lane.b32.xlu0 %v1016, 32
  %v1019 = vpop.permute.xlu0 %1018
  %v1021 = vadd.f32 %v1011, %v1019
  %v1022 = vtanh.pop %v1021
  %1024 = vrot.lane.b32.xlu0 %v1022, 32
  %v1025 = vpop.permute.xlu0 %1024
  %v1027 = vmul.f32 %v1009, %v1025
  %s1028 = scalar_lea.vmem [#allocation3], 24
  %v1029 = vld [vmem:[%s1028] sm:$0xff]
  %v1030 = vpack.c.bf16 %v1027, %v1027
  %1032 = vrot.lane.b32.xlu0 %v1030, 64
  %v1033 = vpop.permute.xlu0 %1032
  %v1035 = vsel %vm43, %v1033, 0
  %1037 = vmatprep.subr.bf16.mxu0 0
  %1038 = vmatpush1.bf16.msra.mxu0 0
  %1039 = vmatprep.subr.bf16.mxu0 0
  %1040 = vmatpush1.bf16.msra.mxu0 0
  %1041 = vmatprep.subr.bf16.mxu0 0
  %1042 = vmatpush1.bf16.msra.mxu0 0
  %1043 = vmatprep.subr.bf16.mxu0 0
  %1044 = vmatpush1.bf16.msra.mxu0 0
  %1045 = vmatprep.subr.bf16.mxu0 0
  %1046 = vmatpush1.bf16.msra.mxu0 0
  %1047 = vmatprep.subr.bf16.mxu0 0
  %1048 = vmatpush1.bf16.msra.mxu0 0
  %1049 = vmatprep.subr.bf16.mxu0 0
  %1050 = vmatpush1.bf16.msra.mxu0 %v812
  %1051 = vmatprep.subr.bf16.mxu0 0
  %1052 = vmatpush1.bf16.msra.mxu0 %v811
  %1053 = vmatprep.subr.bf16.mxu0 0
  %1054 = vmatpush2.bf16.msra.mxu0 0
  %1055 = vmatprep.subr.bf16.mxu0 0
  %1056 = vmatpush2.bf16.msra.mxu0 0
  %1057 = vmatprep.subr.bf16.mxu0 0
  %1058 = vmatpush2.bf16.msra.mxu0 0
  %1059 = vmatprep.subr.bf16.mxu0 0
  %1060 = vmatpush2.bf16.msra.mxu0 0
  %1061 = vmatprep.subr.bf16.mxu0 0
  %1062 = vmatpush2.bf16.msra.mxu0 0
  %1063 = vmatprep.subr.bf16.mxu0 0
  %1064 = vmatpush2.bf16.msra.mxu0 0
  %1065 = vmatprep.subr.bf16.mxu0 0
  %1066 = vmatpush2.bf16.msra.mxu0 0
  %1067 = vmatprep.subr.bf16.mxu0 0
  %1068 = vmatpush2.bf16.msra.mxu0 0
  %1069 = vmatprep.mubr.bf16.mxu0 0
  %1070 = vmatmul.mubr.bf16.gmra.mxu0 %v1035
  %v1071 = vpop.f32.mrf.mxu0
  %v1072 = vadd.f32 0.0, %v1071
  %v1073 = vpop.f32.mrf.mxu0
  %v1074 = vpop.f32.mrf.mxu0
  %v1075 = vpop.f32.mrf.mxu0
  %1076 = vdwg.mxu0
  %v1077 = vadd.f32 %v1029, %v1072
  %v1078 = vxor.u32 %v1077, 2147483648
  %v1079 = vmul.f32 %v1078, 1.442695
  %v1080 = vpow.pop %v1079
  %v1081 = vadd.f32 %v1080, 1.0
  %v1082 = vrcp.pop %v1081
  %v1083 = vmul.f32 1.0, %v1082
  %v1084 = vtanh.pop %v1077
  %v1085 = vmul.f32 %v1083, %v1021
  %1087 = vrot.lane.b32.xlu0 %v1084, 32
  %v1088 = vpop.permute.xlu0 %1087
  %v1090 = vmul.f32 %v1083, %v1088
  %1092 = vrot.lane.b32.xlu0 %v1090, 32
  %v1093 = vpop.permute.xlu0 %1092
  %v1095 = vadd.f32 %v1085, %v1093
  %v1096 = vtanh.pop %v1095
  %1098 = vrot.lane.b32.xlu0 %v1096, 32
  %v1099 = vpop.permute.xlu0 %1098
  %v1101 = vmul.f32 %v1083, %v1099
  %s1102 = scalar_lea.vmem [#allocation3], 32
  %v1103 = vld [vmem:[%s1102] sm:$0xff]
  %v1104 = vpack.c.bf16 %v1101, %v1101
  %1106 = vrot.lane.b32.xlu0 %v1104, 64
  %v1107 = vpop.permute.xlu0 %1106
  %v1109 = vsel %vm43, %v1107, 0
  %1111 = vmatprep.subr.bf16.mxu0 0
  %1112 = vmatpush1.bf16.msra.mxu0 0
  %1113 = vmatprep.subr.bf16.mxu0 0
  %1114 = vmatpush1.bf16.msra.mxu0 0
  %1115 = vmatprep.subr.bf16.mxu0 0
  %1116 = vmatpush1.bf16.msra.mxu0 0
  %1117 = vmatprep.subr.bf16.mxu0 0
  %1118 = vmatpush1.bf16.msra.mxu0 0
  %1119 = vmatprep.subr.bf16.mxu0 0
  %1120 = vmatpush1.bf16.msra.mxu0 0
  %1121 = vmatprep.subr.bf16.mxu0 0
  %1122 = vmatpush1.bf16.msra.mxu0 0
  %1123 = vmatprep.subr.bf16.mxu0 0
  %1124 = vmatpush1.bf16.msra.mxu0 %v812
  %1125 = vmatprep.subr.bf16.mxu0 0
  %1126 = vmatpush1.bf16.msra.mxu0 %v811
  %1127 = vmatprep.subr.bf16.mxu0 0
  %1128 = vmatpush2.bf16.msra.mxu0 0
  %1129 = vmatprep.subr.bf16.mxu0 0
  %1130 = vmatpush2.bf16.msra.mxu0 0
  %1131 = vmatprep.subr.bf16.mxu0 0
  %1132 = vmatpush2.bf16.msra.mxu0 0
  %1133 = vmatprep.subr.bf16.mxu0 0
  %1134 = vmatpush2.bf16.msra.mxu0 0
  %1135 = vmatprep.subr.bf16.mxu0 0
  %1136 = vmatpush2.bf16.msra.mxu0 0
  %1137 = vmatprep.subr.bf16.mxu0 0
  %1138 = vmatpush2.bf16.msra.mxu0 0
  %1139 = vmatprep.subr.bf16.mxu0 0
  %1140 = vmatpush2.bf16.msra.mxu0 0
  %1141 = vmatprep.subr.bf16.mxu0 0
  %1142 = vmatpush2.bf16.msra.mxu0 0
  %1143 = vmatprep.mubr.bf16.mxu0 0
  %1144 = vmatmul.mubr.bf16.gmra.mxu0 %v1109
  %v1145 = vpop.f32.mrf.mxu0
  %v1146 = vadd.f32 0.0, %v1145
  %v1147 = vpop.f32.mrf.mxu0
  %v1148 = vpop.f32.mrf.mxu0
  %v1149 = vpop.f32.mrf.mxu0
  %1150 = vdwg.mxu0
  %v1151 = vadd.f32 %v1103, %v1146
  %v1152 = vxor.u32 %v1151, 2147483648
  %v1153 = vmul.f32 %v1152, 1.442695
  %v1154 = vpow.pop %v1153
  %v1155 = vadd.f32 %v1154, 1.0
  %v1156 = vrcp.pop %v1155
  %v1157 = vmul.f32 1.0, %v1156
  %v1158 = vtanh.pop %v1151
  %v1159 = vmul.f32 %v1157, %v1095
  %1161 = vrot.lane.b32.xlu0 %v1158, 32
  %v1162 = vpop.permute.xlu0 %1161
  %v1164 = vmul.f32 %v1157, %v1162
  %1166 = vrot.lane.b32.xlu0 %v1164, 32
  %v1167 = vpop.permute.xlu0 %1166
  %v1169 = vadd.f32 %v1159, %v1167
  %v1170 = vtanh.pop %v1169
  %1172 = vrot.lane.b32.xlu0 %v1170, 32
  %v1173 = vpop.permute.xlu0 %1172
  %v1175 = vmul.f32 %v1157, %v1173
  %s1176 = scalar_lea.vmem [#allocation3], 40
  %v1177 = vld [vmem:[%s1176] sm:$0xff]
  %v1178 = vpack.c.bf16 %v1175, %v1175
  %1180 = vrot.lane.b32.xlu0 %v1178, 64
  %v1181 = vpop.permute.xlu0 %1180
  %v1183 = vsel %vm43, %v1181, 0
  %1185 = vmatprep.subr.bf16.mxu0 0
  %1186 = vmatpush1.bf16.msra.mxu0 0
  %1187 = vmatprep.subr.bf16.mxu0 0
  %1188 = vmatpush1.bf16.msra.mxu0 0
  %1189 = vmatprep.subr.bf16.mxu0 0
  %1190 = vmatpush1.bf16.msra.mxu0 0
  %1191 = vmatprep.subr.bf16.mxu0 0
  %1192 = vmatpush1.bf16.msra.mxu0 0
  %1193 = vmatprep.subr.bf16.mxu0 0
  %1194 = vmatpush1.bf16.msra.mxu0 0
  %1195 = vmatprep.subr.bf16.mxu0 0
  %1196 = vmatpush1.bf16.msra.mxu0 0
  %1197 = vmatprep.subr.bf16.mxu0 0
  %1198 = vmatpush1.bf16.msra.mxu0 %v812
  %1199 = vmatprep.subr.bf16.mxu0 0
  %1200 = vmatpush1.bf16.msra.mxu0 %v811
  %1201 = vmatprep.subr.bf16.mxu0 0
  %1202 = vmatpush2.bf16.msra.mxu0 0
  %1203 = vmatprep.subr.bf16.mxu0 0
  %1204 = vmatpush2.bf16.msra.mxu0 0
  %1205 = vmatprep.subr.bf16.mxu0 0
  %1206 = vmatpush2.bf16.msra.mxu0 0
  %1207 = vmatprep.subr.bf16.mxu0 0
  %1208 = vmatpush2.bf16.msra.mxu0 0
  %1209 = vmatprep.subr.bf16.mxu0 0
  %1210 = vmatpush2.bf16.msra.mxu0 0
  %1211 = vmatprep.subr.bf16.mxu0 0
  %1212 = vmatpush2.bf16.msra.mxu0 0
  %1213 = vmatprep.subr.bf16.mxu0 0
  %1214 = vmatpush2.bf16.msra.mxu0 0
  %1215 = vmatprep.subr.bf16.mxu0 0
  %1216 = vmatpush2.bf16.msra.mxu0 0
  %1217 = vmatprep.mubr.bf16.mxu0 0
  %1218 = vmatmul.mubr.bf16.gmra.mxu0 %v1183
  %v1219 = vpop.f32.mrf.mxu0
  %v1220 = vadd.f32 0.0, %v1219
  %v1221 = vpop.f32.mrf.mxu0
  %v1222 = vpop.f32.mrf.mxu0
  %v1223 = vpop.f32.mrf.mxu0
  %1224 = vdwg.mxu0
  %v1225 = vadd.f32 %v1177, %v1220
  %v1226 = vxor.u32 %v1225, 2147483648
  %v1227 = vmul.f32 %v1226, 1.442695
  %v1228 = vpow.pop %v1227
  %v1229 = vadd.f32 %v1228, 1.0
  %v1230 = vrcp.pop %v1229
  %v1231 = vmul.f32 1.0, %v1230
  %v1232 = vtanh.pop %v1225
  %v1233 = vmul.f32 %v1231, %v1169
  %1235 = vrot.lane.b32.xlu0 %v1232, 32
  %v1236 = vpop.permute.xlu0 %1235
  %v1238 = vmul.f32 %v1231, %v1236
  %1240 = vrot.lane.b32.xlu0 %v1238, 32
  %v1241 = vpop.permute.xlu0 %1240
  %v1243 = vadd.f32 %v1233, %v1241
  %v1244 = vtanh.pop %v1243
  %1246 = vrot.lane.b32.xlu0 %v1244, 32
  %v1247 = vpop.permute.xlu0 %1246
  %v1249 = vmul.f32 %v1231, %v1247
  %s1250 = scalar_lea.vmem [#allocation3], 48
  %v1251 = vld [vmem:[%s1250] sm:$0xff]
  %v1252 = vpack.c.bf16 %v1249, %v1249
  %1254 = vrot.lane.b32.xlu0 %v1252, 64
  %v1255 = vpop.permute.xlu0 %1254
  %v1257 = vsel %vm43, %v1255, 0
  %1259 = vmatprep.subr.bf16.mxu0 0
  %1260 = vmatpush1.bf16.msra.mxu0 0
  %1261 = vmatprep.subr.bf16.mxu0 0
  %1262 = vmatpush1.bf16.msra.mxu0 0
  %1263 = vmatprep.subr.bf16.mxu0 0
  %1264 = vmatpush1.bf16.msra.mxu0 0
  %1265 = vmatprep.subr.bf16.mxu0 0
  %1266 = vmatpush1.bf16.msra.mxu0 0
  %1267 = vmatprep.subr.bf16.mxu0 0
  %1268 = vmatpush1.bf16.msra.mxu0 0
  %1269 = vmatprep.subr.bf16.mxu0 0
  %1270 = vmatpush1.bf16.msra.mxu0 0
  %1271 = vmatprep.subr.bf16.mxu0 0
  %1272 = vmatpush1.bf16.msra.mxu0 %v812
  %1273 = vmatprep.subr.bf16.mxu0 0
  %1274 = vmatpush1.bf16.msra.mxu0 %v811
  %1275 = vmatprep.subr.bf16.mxu0 0
  %1276 = vmatpush2.bf16.msra.mxu0 0
  %1277 = vmatprep.subr.bf16.mxu0 0
  %1278 = vmatpush2.bf16.msra.mxu0 0
  %1279 = vmatprep.subr.bf16.mxu0 0
  %1280 = vmatpush2.bf16.msra.mxu0 0
  %1281 = vmatprep.subr.bf16.mxu0 0
  %1282 = vmatpush2.bf16.msra.mxu0 0
  %1283 = vmatprep.subr.bf16.mxu0 0
  %1284 = vmatpush2.bf16.msra.mxu0 0
  %1285 = vmatprep.subr.bf16.mxu0 0
  %1286 = vmatpush2.bf16.msra.mxu0 0
  %1287 = vmatprep.subr.bf16.mxu0 0
  %1288 = vmatpush2.bf16.msra.mxu0 0
  %1289 = vmatprep.subr.bf16.mxu0 0
  %1290 = vmatpush2.bf16.msra.mxu0 0
  %1291 = vmatprep.mubr.bf16.mxu0 0
  %1292 = vmatmul.mubr.bf16.gmra.mxu0 %v1257
  %v1293 = vpop.f32.mrf.mxu0
  %v1294 = vadd.f32 0.0, %v1293
  %v1295 = vpop.f32.mrf.mxu0
  %v1296 = vpop.f32.mrf.mxu0
  %v1297 = vpop.f32.mrf.mxu0
  %1298 = vdwg.mxu0
  %v1299 = vadd.f32 %v1251, %v1294
  %v1300 = vxor.u32 %v1299, 2147483648
  %v1301 = vmul.f32 %v1300, 1.442695
  %v1302 = vpow.pop %v1301
  %v1303 = vadd.f32 %v1302, 1.0
  %v1304 = vrcp.pop %v1303
  %v1305 = vmul.f32 1.0, %v1304
  %v1306 = vtanh.pop %v1299
  %v1307 = vmul.f32 %v1305, %v1243
  %1309 = vrot.lane.b32.xlu0 %v1306, 32
  %v1310 = vpop.permute.xlu0 %1309
  %v1312 = vmul.f32 %v1305, %v1310
  %1314 = vrot.lane.b32.xlu0 %v1312, 32
  %v1315 = vpop.permute.xlu0 %1314
  %v1317 = vadd.f32 %v1307, %v1315
  %v1318 = vtanh.pop %v1317
  %1320 = vrot.lane.b32.xlu0 %v1318, 32
  %v1321 = vpop.permute.xlu0 %1320
  %v1323 = vmul.f32 %v1305, %v1321
  %s1324 = scalar_lea.vmem [#allocation3], 56
  %v1325 = vld [vmem:[%s1324] sm:$0xff]
  %v1326 = vpack.c.bf16 %v1323, %v1323
  %1328 = vrot.lane.b32.xlu0 %v1326, 64
  %v1329 = vpop.permute.xlu0 %1328
  %v1331 = vsel %vm43, %v1329, 0
  %1333 = vmatprep.subr.bf16.mxu0 0
  %1334 = vmatpush1.bf16.msra.mxu0 0
  %1335 = vmatprep.subr.bf16.mxu0 0
  %1336 = vmatpush1.bf16.msra.mxu0 0
  %1337 = vmatprep.subr.bf16.mxu0 0
  %1338 = vmatpush1.bf16.msra.mxu0 0
  %1339 = vmatprep.subr.bf16.mxu0 0
  %1340 = vmatpush1.bf16.msra.mxu0 0
  %1341 = vmatprep.subr.bf16.mxu0 0
  %1342 = vmatpush1.bf16.msra.mxu0 0
  %1343 = vmatprep.subr.bf16.mxu0 0
  %1344 = vmatpush1.bf16.msra.mxu0 0
  %1345 = vmatprep.subr.bf16.mxu0 0
  %1346 = vmatpush1.bf16.msra.mxu0 %v812
  %1347 = vmatprep.subr.bf16.mxu0 0
  %1348 = vmatpush1.bf16.msra.mxu0 %v811
  %1349 = vmatprep.subr.bf16.mxu0 0
  %1350 = vmatpush2.bf16.msra.mxu0 0
  %1351 = vmatprep.subr.bf16.mxu0 0
  %1352 = vmatpush2.bf16.msra.mxu0 0
  %1353 = vmatprep.subr.bf16.mxu0 0
  %1354 = vmatpush2.bf16.msra.mxu0 0
  %1355 = vmatprep.subr.bf16.mxu0 0
  %1356 = vmatpush2.bf16.msra.mxu0 0
  %1357 = vmatprep.subr.bf16.mxu0 0
  %1358 = vmatpush2.bf16.msra.mxu0 0
  %1359 = vmatprep.subr.bf16.mxu0 0
  %1360 = vmatpush2.bf16.msra.mxu0 0
  %1361 = vmatprep.subr.bf16.mxu0 0
  %1362 = vmatpush2.bf16.msra.mxu0 0
  %1363 = vmatprep.subr.bf16.mxu0 0
  %1364 = vmatpush2.bf16.msra.mxu0 0
  %1365 = vmatprep.mubr.bf16.mxu0 0
  %1366 = vmatmul.mubr.bf16.gmra.mxu0 %v1331
  %v1367 = vpop.f32.mrf.mxu0
  %v1368 = vadd.f32 0.0, %v1367
  %v1369 = vpop.f32.mrf.mxu0
  %v1370 = vpop.f32.mrf.mxu0
  %v1371 = vpop.f32.mrf.mxu0
  %1372 = vdwg.mxu0
  %v1373 = vadd.f32 %v1325, %v1368
  %v1374 = vxor.u32 %v1373, 2147483648
  %v1375 = vmul.f32 %v1374, 1.442695
  %v1376 = vpow.pop %v1375
  %v1377 = vadd.f32 %v1376, 1.0
  %v1378 = vrcp.pop %v1377
  %v1379 = vmul.f32 1.0, %v1378
  %v1380 = vtanh.pop %v1373
  %v1381 = vmul.f32 %v1379, %v1317
  %1383 = vrot.lane.b32.xlu0 %v1380, 32
  %v1384 = vpop.permute.xlu0 %1383
  %v1386 = vmul.f32 %v1379, %v1384
  %1388 = vrot.lane.b32.xlu0 %v1386, 32
  %v1389 = vpop.permute.xlu0 %1388
  %v1391 = vadd.f32 %v1381, %v1389
  %v1392 = vtanh.pop %v1391
  %1394 = vrot.lane.b32.xlu0 %v1392, 32
  %v1395 = vpop.permute.xlu0 %1394
  %v1397 = vmul.f32 %v1379, %v1395
  %v1398 = vld [vmem:[%s4] sm:$0x1]
  %v1400 = vlaneseq
  %v1401 = vshrl.u32 %v1400, 7
  %v1402 = vsub.s32 0, %v1401
  %v1403 = vrot.slane %v1398, %v1402
  %1404 = vrot.lane.b32.xlu0 %v1403, 64
  %v1405 = vpop.permute.xlu0 %1404
  %v1407 = vmul.f32 %v1397, %v1405
  %1409 = vrot.lane.b32.xlu0 %v1407, 64
  %v1410 = vpop.permute.xlu0 %1409
  %vm1412 = vcmask 254976
  %v1413 = vsel %vm1412, %v1410, 0.0
  %1414 = vadd.xlane.f32.xlu0 %v1413
  %v1415 = vpop.xlane.xlu0 %1414
  %v1416 = vld [vmem:[#allocation4] sm:$0x1]
  %v1418 = vlaneseq
  %v1419 = vshrl.u32 %v1418, 7
  %v1420 = vsub.s32 0, %v1419
  %v1421 = vrot.slane %v1416, %v1420
  %v1423 = vadd.f32 %v1415, %v1421
  %v1424 = vxor.u32 %v1423, 2147483648
  %v1425 = vmul.f32 %v1424, 1.442695
  %v1426 = vpow.pop %v1425
  %v1427 = vadd.f32 %v1426, 1.0
  %v1428 = vrcp.pop %v1427
  %v1429 = vmul.f32 1.0, %v1428
  %vm1430 = vcmask 1024
  %1431 = vst.msk [vmem:[%s6] sm:$0x3] %vm1430, %v1429
  // Predicated region
  $region26: #{lstm_net_forward.1} parent=0 // pred_check
    _
  $region27: #{lstm_net_forward.1} parent=0 // pred_check_branch
    %1433 = sbr.rel (0) target = $region29
  $region28: #{lstm_net_forward.1} parent=0 // pred_region
    _
  $region29: #{lstm_net_forward.1} parent=0 // pred_fallthru
    _
  // Predicated region
  $region30: #{lstm_net_forward.1} parent=0 // pred_check
    _
  $region31: #{lstm_net_forward.1} parent=0 // pred_check_branch
    %1435 = sbr.rel (0) target = $region33
  $region32: #{lstm_net_forward.1} parent=0 // pred_region
    _
  $region33: #{lstm_net_forward.1} parent=0 // pred_fallthru
    _

</llo_original>
